<compile_context>
chip_gen: v7x
topology: tpu7x:2x2x1
jax: 0.10.0
libtpu: 0.0.40
codegen_flags: <defaults>
</compile_context>

<pallas_src>
import functools

import jax
import jax.numpy as jnp
from jax.experimental import pallas as pl
from jax.experimental.pallas import tpu as pltpu

NEG_SLOPE = 0.01  # torch F.leaky_relu default negative_slope
LANE = 128


def _pad_to(n, m):
    return ((n + m - 1) // m) * m


def _leaky_relu(x):
    return jnp.where(x > 0, x, NEG_SLOPE * x)


def _mlp_kernel(x_ref,
                w_in, b_in,
                w_pre, b_pre,
                w_hid, b_hid,
                w_p0, b_p0,
                w_p1, b_p1,
                w_out, b_out,
                o_ref,
                *, n_layers):
    """Fused MLP forward for one batch tile. All matmuls hit the MXU (bf16 x bf16 -> f32)."""
    cdt = w_in.dtype  # compute dtype for MXU inputs (bf16 by default)

    def layer(h, w, b, act=True):
        y = jnp.dot(h, w, preferred_element_type=jnp.float32) + b  # f32 accumulate
        return _leaky_relu(y) if act else y

    h = x_ref[...]                                                  # (tile_b, in_pad) cdt
    h = layer(h, w_in[...], b_in[...]).astype(cdt)
    h = layer(h, w_pre[...], b_pre[...]).astype(cdt)

    if n_layers <= 8:
        # Small static trip count -> unroll at trace time (optimal for few layers).
        for i in range(n_layers):
            h = layer(h, w_hid[i], b_hid[i]).astype(cdt)
    else:
        # Bound live ranges / code size for deep stacks.
        def body(i, carry):
            return layer(carry, w_hid[i], b_hid[i]).astype(cdt)
        h = jax.lax.fori_loop(0, n_layers, body, h)

    h = layer(h, w_p0[...], b_p0[...]).astype(cdt)
    h = layer(h, w_p1[...], b_p1[...]).astype(cdt)
    h = layer(h, w_out[...], b_out[...], act=False)                 # (tile_b, 128) f32
    # Lane-dense full-width store; only column 0 is the real output.
    o_ref[...] = jax.nn.sigmoid(h).astype(o_ref.dtype)


def _prepare_params(params, compute_dtype):
    """Zero-pad every feature dim to a multiple of 128; cast weights to compute_dtype."""
    (w_in, b_in, w_pre, b_pre, w_hid, b_hid,
     w_p0, b_p0, w_p1, b_p1, w_out, b_out) = params

    def pad_w(w):
        fi, fo = w.shape[-2], w.shape[-1]
        pads = [(0, 0)] * (w.ndim - 2) + [(0, _pad_to(fi, LANE) - fi),
                                          (0, _pad_to(fo, LANE) - fo)]
        return jnp.pad(w, pads).astype(compute_dtype)

    def pad_b(b):
        fo = b.shape[-1]
        pads = [(0, 0)] * (b.ndim - 1) + [(0, _pad_to(fo, LANE) - fo)]
        return jnp.pad(b, pads).astype(jnp.float32)

    return [pad_w(w_in), pad_b(b_in),
            pad_w(w_pre), pad_b(b_pre),
            pad_w(w_hid), pad_b(b_hid),
            pad_w(w_p0), pad_b(b_p0),
            pad_w(w_p1), pad_b(b_p1),
            pad_w(w_out), pad_b(b_out)]


def _choose_tile_b(batch):
    """Big tiles for MXU occupancy, but keep >=2 grid steps for v7x megacore when possible."""
    tile_b = min(512, max(8, _pad_to(batch, 8)))
    if batch >= 16 and pl.cdiv(batch, tile_b) < 2:
        tile_b = max(8, _pad_to(batch // 2, 8))
    return tile_b


def _replicated(arr):
    zero = (0,) * arr.ndim
    return pl.BlockSpec(arr.shape, lambda i, _z=zero: _z)


def ann_with_sigmoid_forward(x, params, n_layers, *, tile_b=None,
                             compute_dtype=jnp.bfloat16):
    """x: (B, inUnits) f32. params: flat list of weights/biases (see init_params)."""
    B, in_units = x.shape
    padded = _prepare_params(params, compute_dtype)
    in_pad = padded[0].shape[0]

    if tile_b is None:
        tile_b = _choose_tile_b(B)
    b_pad = pl.cdiv(B, tile_b) * tile_b

    # Pad input rows (batch tail) and feature columns; cast to the MXU dtype.
    x_p = jnp.pad(x, ((0, b_pad - B), (0, in_pad - in_units))).astype(compute_dtype)

    grid = (b_pad // tile_b,)
    in_specs = [pl.BlockSpec((tile_b, in_pad), lambda i: (i, 0))]
    in_specs += [_replicated(p) for p in padded]
    out_specs = pl.BlockSpec((tile_b, LANE), lambda i: (i, 0))
    out_shape = jax.ShapeDtypeStruct((b_pad, LANE), jnp.float32)

    # Advisory cost model (padded sizes).
    weight_elems = sum(int(p.size) for p in padded[0::2])     # all weight matrices
    flops = 2 * b_pad * weight_elems // max(1, 1)             # matmul MACs * 2
    transcendentals = b_pad * LANE                            # sigmoid
    bytes_accessed = (x_p.size * x_p.dtype.itemsize
                      + sum(int(p.size) * p.dtype.itemsize for p in padded)
                      + b_pad * LANE * 4)

    out = pl.pallas_call(
        functools.partial(_mlp_kernel, n_layers=n_layers),
        grid=grid,
        in_specs=in_specs,
        out_specs=out_specs,
        out_shape=out_shape,
        compiler_params=pltpu.CompilerParams(
            dimension_semantics=("parallel",)),
        cost_estimate=pl.CostEstimate(flops=flops,
                                      transcendentals=transcendentals,
                                      bytes_accessed=bytes_accessed),
    )(x_p, *padded)

    return out[:B, :1]


def init_params(key, in_units, n_units, n_layers):
    """Deterministic init mimicking PyTorch Linear default (U(-1/sqrt(fan_in), ..))."""
    def linear(key, fan_in, fan_out):
        kw, kb = jax.random.split(key)
        bound = 1.0 / jnp.sqrt(jnp.float32(fan_in))
        w = jax.random.uniform(kw, (fan_in, fan_out), jnp.float32, -bound, bound)
        b = jax.random.uniform(kb, (1, fan_out), jnp.float32, -bound, bound)
        return w, b

    keys = jax.random.split(key, 6 + n_layers)
    w_in, b_in = linear(keys[0], in_units, 200)
    w_pre, b_pre = linear(keys[1], 200, n_units)
    w_h, b_h = [], []
    for i in range(n_layers):
        w, b = linear(keys[2 + i], n_units, n_units)
        w_h.append(w)
        b_h.append(b)
    w_hid = jnp.stack(w_h, axis=0)                      # (nLayers, nUnits, nUnits)
    b_hid = jnp.stack(b_h, axis=0)                      # (nLayers, 1, nUnits)
    w_p0, b_p0 = linear(keys[2 + n_layers], n_units, 50)
    w_p1, b_p1 = linear(keys[3 + n_layers], 50, 50)
    w_out, b_out = linear(keys[4 + n_layers], 50, 1)
    return [w_in, b_in, w_pre, b_pre, w_hid, b_hid,
            w_p0, b_p0, w_p1, b_p1, w_out, b_out]


def reference_forward(x, params, n_layers):
    """Plain-JAX f32 reference with identical semantics (for sanity check)."""
    (w_in, b_in, w_pre, b_pre, w_hid, b_hid,
     w_p0, b_p0, w_p1, b_p1, w_out, b_out) = params
    h = _leaky_relu(x @ w_in + b_in)
    h = _leaky_relu(h @ w_pre + b_pre)
    for i in range(n_layers):
        h = _leaky_relu(h @ w_hid[i] + b_hid[i])
    h = _leaky_relu(h @ w_p0 + b_p0)
    h = _leaky_relu(h @ w_p1 + b_p1)
    h = h @ w_out + b_out
    return jax.nn.sigmoid(h)


if __name__ == "__main__":
    # Module hyperparameters (selfdr is irrelevant at inference).
    in_units = 32
    n_units = 64
    n_layers = 2
    batch = 256  # -> auto tile_b=128, grid=(2,): exercises tiling + megacore sharding

    key = jax.random.PRNGKey(0)
    k_x, k_p = jax.random.split(key)
    x = jax.random.normal(k_x, (batch, in_units), jnp.float32)
    params = init_params(k_p, in_units, n_units, n_layers)

    out = ann_with_sigmoid_forward(x, params, n_layers)
    out = jax.block_until_ready(out)

    ref = reference_forward(x, params, n_layers)
    assert out.shape == (batch, 1)
    # bf16 MXU inputs with f32 accumulation -> loosened tolerance vs f32 reference.
    assert jnp.max(jnp.abs(out - ref)) < 2e-2, "Pallas output mismatch vs JAX reference"

    print("KERNEL_OK")
</pallas_src>

<mosaic_0001>
module attributes {stable_mosaic.version = 11 : i64} {
  func.func @_mlp_kernel(%arg0: i32, %arg1: memref<128x128xbf16, #tpu.memory_space<vmem>>, %arg2: memref<128x256xbf16, #tpu.memory_space<vmem>>, %arg3: memref<1x256xf32, #tpu.memory_space<vmem>>, %arg4: memref<256x128xbf16, #tpu.memory_space<vmem>>, %arg5: memref<1x128xf32, #tpu.memory_space<vmem>>, %arg6: memref<2x128x128xbf16, #tpu.memory_space<vmem>>, %arg7: memref<2x1x128xf32, #tpu.memory_space<vmem>>, %arg8: memref<128x128xbf16, #tpu.memory_space<vmem>>, %arg9: memref<1x128xf32, #tpu.memory_space<vmem>>, %arg10: memref<128x128xbf16, #tpu.memory_space<vmem>>, %arg11: memref<1x128xf32, #tpu.memory_space<vmem>>, %arg12: memref<128x128xbf16, #tpu.memory_space<vmem>>, %arg13: memref<1x128xf32, #tpu.memory_space<vmem>>, %arg14: memref<128x128xf32, #tpu.memory_space<vmem>>) attributes {dimension_semantics = [#tpu.dimension_semantics<parallel>], iteration_bounds = array<i64: 2>, scalar_prefetch = 0 : i64, scratch_operands = 0 : i64, tpu.core_type = #tpu.core_type<tc>, window_params = [{transform_indices = @transform_0, window_bounds = array<i64: 128, 128>}, {pipeline_mode = #tpu.pipeline_mode<synchronous>, transform_indices = @transform_1, window_bounds = array<i64: 128, 256>}, {pipeline_mode = #tpu.pipeline_mode<synchronous>, transform_indices = @transform_2, window_bounds = array<i64: 1, 256>}, {pipeline_mode = #tpu.pipeline_mode<synchronous>, transform_indices = @transform_3, window_bounds = array<i64: 256, 128>}, {pipeline_mode = #tpu.pipeline_mode<synchronous>, transform_indices = @transform_4, window_bounds = array<i64: 1, 128>}, {pipeline_mode = #tpu.pipeline_mode<synchronous>, transform_indices = @transform_5, window_bounds = array<i64: 2, 128, 128>}, {pipeline_mode = #tpu.pipeline_mode<synchronous>, transform_indices = @transform_6, window_bounds = array<i64: 2, 1, 128>}, {pipeline_mode = #tpu.pipeline_mode<synchronous>, transform_indices = @transform_7, window_bounds = array<i64: 128, 128>}, {pipeline_mode = #tpu.pipeline_mode<synchronous>, transform_indices = @transform_8, window_bounds = array<i64: 1, 128>}, {pipeline_mode = #tpu.pipeline_mode<synchronous>, transform_indices = @transform_9, window_bounds = array<i64: 128, 128>}, {pipeline_mode = #tpu.pipeline_mode<synchronous>, transform_indices = @transform_10, window_bounds = array<i64: 1, 128>}, {pipeline_mode = #tpu.pipeline_mode<synchronous>, transform_indices = @transform_11, window_bounds = array<i64: 128, 128>}, {pipeline_mode = #tpu.pipeline_mode<synchronous>, transform_indices = @transform_12, window_bounds = array<i64: 1, 128>}, {transform_indices = @transform_13, window_bounds = array<i64: 128, 128>}]} {
    %c0 = arith.constant 0 : index
    %c0_0 = arith.constant 0 : index
    %0 = vector.load %arg1[%c0, %c0_0] : memref<128x128xbf16, #tpu.memory_space<vmem>>, vector<128x128xbf16>
    %c0_1 = arith.constant 0 : index
    %c0_2 = arith.constant 0 : index
    %1 = vector.load %arg2[%c0_1, %c0_2] : memref<128x256xbf16, #tpu.memory_space<vmem>>, vector<128x256xbf16>
    %c0_3 = arith.constant 0 : index
    %c0_4 = arith.constant 0 : index
    %2 = vector.load %arg3[%c0_3, %c0_4] : memref<1x256xf32, #tpu.memory_space<vmem>>, vector<1x256xf32>
    %cst = arith.constant dense<0.000000e+00> : vector<128x256xf32>
    %3 = tpu.matmul %0, %1, %cst {dimension_numbers = #tpu.dot_dimension_numbers<[1], [0], [0], [1], [0, 0, 1, 1], [], []>} : vector<128x128xbf16>, vector<128x256xbf16>, vector<128x256xf32> -> vector<128x256xf32>
    %4 = vector.broadcast %2 : vector<1x256xf32> to vector<128x256xf32>
    %5 = arith.addf %3, %4 : vector<128x256xf32>
    %cst_5 = arith.constant 0.000000e+00 : f32
    %6 = vector.broadcast %cst_5 : f32 to vector<128x256xf32>
    %7 = arith.cmpf ogt, %5, %6 : vector<128x256xf32>
    %cst_6 = arith.constant 0.00999999977 : f32
    %8 = vector.broadcast %cst_6 : f32 to vector<128x256xf32>
    %9 = arith.mulf %8, %5 : vector<128x256xf32>
    %10 = arith.select %7, %5, %9 : vector<128x256xi1>, vector<128x256xf32>
    %11 = arith.truncf %10 : vector<128x256xf32> to vector<128x256xbf16>
    %c0_7 = arith.constant 0 : index
    %c0_8 = arith.constant 0 : index
    %12 = vector.load %arg4[%c0_7, %c0_8] : memref<256x128xbf16, #tpu.memory_space<vmem>>, vector<256x128xbf16>
    %c0_9 = arith.constant 0 : index
    %c0_10 = arith.constant 0 : index
    %13 = vector.load %arg5[%c0_9, %c0_10] : memref<1x128xf32, #tpu.memory_space<vmem>>, vector<1x128xf32>
    %cst_11 = arith.constant dense<0.000000e+00> : vector<128x128xf32>
    %14 = tpu.matmul %11, %12, %cst_11 {dimension_numbers = #tpu.dot_dimension_numbers<[1], [0], [0], [1], [0, 0, 1, 1], [], []>} : vector<128x256xbf16>, vector<256x128xbf16>, vector<128x128xf32> -> vector<128x128xf32>
    %15 = vector.broadcast %13 : vector<1x128xf32> to vector<128x128xf32>
    %16 = arith.addf %14, %15 : vector<128x128xf32>
    %cst_12 = arith.constant 0.000000e+00 : f32
    %17 = vector.broadcast %cst_12 : f32 to vector<128x128xf32>
    %18 = arith.cmpf ogt, %16, %17 : vector<128x128xf32>
    %cst_13 = arith.constant 0.00999999977 : f32
    %19 = vector.broadcast %cst_13 : f32 to vector<128x128xf32>
    %20 = arith.mulf %19, %16 : vector<128x128xf32>
    %21 = arith.select %18, %16, %20 : vector<128x128xi1>, vector<128x128xf32>
    %22 = arith.truncf %21 : vector<128x128xf32> to vector<128x128xbf16>
    %c0_14 = arith.constant 0 : index
    %c0_15 = arith.constant 0 : index
    %c0_16 = arith.constant 0 : index
    %23 = vector.load %arg6[%c0_14, %c0_15, %c0_16] : memref<2x128x128xbf16, #tpu.memory_space<vmem>>, vector<1x128x128xbf16>
    %24 = vector.shape_cast %23 : vector<1x128x128xbf16> to vector<128x128xbf16>
    %c0_17 = arith.constant 0 : index
    %c0_18 = arith.constant 0 : index
    %c0_19 = arith.constant 0 : index
    %25 = vector.load %arg7[%c0_17, %c0_18, %c0_19] : memref<2x1x128xf32, #tpu.memory_space<vmem>>, vector<1x1x128xf32>
    %26 = vector.shape_cast %25 : vector<1x1x128xf32> to vector<1x128xf32>
    %cst_20 = arith.constant dense<0.000000e+00> : vector<128x128xf32>
    %27 = tpu.matmul %22, %24, %cst_20 {dimension_numbers = #tpu.dot_dimension_numbers<[1], [0], [0], [1], [0, 0, 1, 1], [], []>} : vector<128x128xbf16>, vector<128x128xbf16>, vector<128x128xf32> -> vector<128x128xf32>
    %28 = vector.broadcast %26 : vector<1x128xf32> to vector<128x128xf32>
    %29 = arith.addf %27, %28 : vector<128x128xf32>
    %cst_21 = arith.constant 0.000000e+00 : f32
    %30 = vector.broadcast %cst_21 : f32 to vector<128x128xf32>
    %31 = arith.cmpf ogt, %29, %30 : vector<128x128xf32>
    %cst_22 = arith.constant 0.00999999977 : f32
    %32 = vector.broadcast %cst_22 : f32 to vector<128x128xf32>
    %33 = arith.mulf %32, %29 : vector<128x128xf32>
    %34 = arith.select %31, %29, %33 : vector<128x128xi1>, vector<128x128xf32>
    %35 = arith.truncf %34 : vector<128x128xf32> to vector<128x128xbf16>
    %c1 = arith.constant 1 : index
    %c0_23 = arith.constant 0 : index
    %c0_24 = arith.constant 0 : index
    %36 = vector.load %arg6[%c1, %c0_23, %c0_24] : memref<2x128x128xbf16, #tpu.memory_space<vmem>>, vector<1x128x128xbf16>
    %37 = vector.shape_cast %36 : vector<1x128x128xbf16> to vector<128x128xbf16>
    %c1_25 = arith.constant 1 : index
    %c0_26 = arith.constant 0 : index
    %c0_27 = arith.constant 0 : index
    %38 = vector.load %arg7[%c1_25, %c0_26, %c0_27] : memref<2x1x128xf32, #tpu.memory_space<vmem>>, vector<1x1x128xf32>
    %39 = vector.shape_cast %38 : vector<1x1x128xf32> to vector<1x128xf32>
    %cst_28 = arith.constant dense<0.000000e+00> : vector<128x128xf32>
    %40 = tpu.matmul %35, %37, %cst_28 {dimension_numbers = #tpu.dot_dimension_numbers<[1], [0], [0], [1], [0, 0, 1, 1], [], []>} : vector<128x128xbf16>, vector<128x128xbf16>, vector<128x128xf32> -> vector<128x128xf32>
    %41 = vector.broadcast %39 : vector<1x128xf32> to vector<128x128xf32>
    %42 = arith.addf %40, %41 : vector<128x128xf32>
    %cst_29 = arith.constant 0.000000e+00 : f32
    %43 = vector.broadcast %cst_29 : f32 to vector<128x128xf32>
    %44 = arith.cmpf ogt, %42, %43 : vector<128x128xf32>
    %cst_30 = arith.constant 0.00999999977 : f32
    %45 = vector.broadcast %cst_30 : f32 to vector<128x128xf32>
    %46 = arith.mulf %45, %42 : vector<128x128xf32>
    %47 = arith.select %44, %42, %46 : vector<128x128xi1>, vector<128x128xf32>
    %48 = arith.truncf %47 : vector<128x128xf32> to vector<128x128xbf16>
    %c0_31 = arith.constant 0 : index
    %c0_32 = arith.constant 0 : index
    %49 = vector.load %arg8[%c0_31, %c0_32] : memref<128x128xbf16, #tpu.memory_space<vmem>>, vector<128x128xbf16>
    %c0_33 = arith.constant 0 : index
    %c0_34 = arith.constant 0 : index
    %50 = vector.load %arg9[%c0_33, %c0_34] : memref<1x128xf32, #tpu.memory_space<vmem>>, vector<1x128xf32>
    %cst_35 = arith.constant dense<0.000000e+00> : vector<128x128xf32>
    %51 = tpu.matmul %48, %49, %cst_35 {dimension_numbers = #tpu.dot_dimension_numbers<[1], [0], [0], [1], [0, 0, 1, 1], [], []>} : vector<128x128xbf16>, vector<128x128xbf16>, vector<128x128xf32> -> vector<128x128xf32>
    %52 = vector.broadcast %50 : vector<1x128xf32> to vector<128x128xf32>
    %53 = arith.addf %51, %52 : vector<128x128xf32>
    %cst_36 = arith.constant 0.000000e+00 : f32
    %54 = vector.broadcast %cst_36 : f32 to vector<128x128xf32>
    %55 = arith.cmpf ogt, %53, %54 : vector<128x128xf32>
    %cst_37 = arith.constant 0.00999999977 : f32
    %56 = vector.broadcast %cst_37 : f32 to vector<128x128xf32>
    %57 = arith.mulf %56, %53 : vector<128x128xf32>
    %58 = arith.select %55, %53, %57 : vector<128x128xi1>, vector<128x128xf32>
    %59 = arith.truncf %58 : vector<128x128xf32> to vector<128x128xbf16>
    %c0_38 = arith.constant 0 : index
    %c0_39 = arith.constant 0 : index
    %60 = vector.load %arg10[%c0_38, %c0_39] : memref<128x128xbf16, #tpu.memory_space<vmem>>, vector<128x128xbf16>
    %c0_40 = arith.constant 0 : index
    %c0_41 = arith.constant 0 : index
    %61 = vector.load %arg11[%c0_40, %c0_41] : memref<1x128xf32, #tpu.memory_space<vmem>>, vector<1x128xf32>
    %cst_42 = arith.constant dense<0.000000e+00> : vector<128x128xf32>
    %62 = tpu.matmul %59, %60, %cst_42 {dimension_numbers = #tpu.dot_dimension_numbers<[1], [0], [0], [1], [0, 0, 1, 1], [], []>} : vector<128x128xbf16>, vector<128x128xbf16>, vector<128x128xf32> -> vector<128x128xf32>
    %63 = vector.broadcast %61 : vector<1x128xf32> to vector<128x128xf32>
    %64 = arith.addf %62, %63 : vector<128x128xf32>
    %cst_43 = arith.constant 0.000000e+00 : f32
    %65 = vector.broadcast %cst_43 : f32 to vector<128x128xf32>
    %66 = arith.cmpf ogt, %64, %65 : vector<128x128xf32>
    %cst_44 = arith.constant 0.00999999977 : f32
    %67 = vector.broadcast %cst_44 : f32 to vector<128x128xf32>
    %68 = arith.mulf %67, %64 : vector<128x128xf32>
    %69 = arith.select %66, %64, %68 : vector<128x128xi1>, vector<128x128xf32>
    %70 = arith.truncf %69 : vector<128x128xf32> to vector<128x128xbf16>
    %c0_45 = arith.constant 0 : index
    %c0_46 = arith.constant 0 : index
    %71 = vector.load %arg12[%c0_45, %c0_46] : memref<128x128xbf16, #tpu.memory_space<vmem>>, vector<128x128xbf16>
    %c0_47 = arith.constant 0 : index
    %c0_48 = arith.constant 0 : index
    %72 = vector.load %arg13[%c0_47, %c0_48] : memref<1x128xf32, #tpu.memory_space<vmem>>, vector<1x128xf32>
    %cst_49 = arith.constant dense<0.000000e+00> : vector<128x128xf32>
    %73 = tpu.matmul %70, %71, %cst_49 {dimension_numbers = #tpu.dot_dimension_numbers<[1], [0], [0], [1], [0, 0, 1, 1], [], []>} : vector<128x128xbf16>, vector<128x128xbf16>, vector<128x128xf32> -> vector<128x128xf32>
    %74 = vector.broadcast %72 : vector<1x128xf32> to vector<128x128xf32>
    %75 = arith.addf %73, %74 : vector<128x128xf32>
    %76 = arith.negf %75 : vector<128x128xf32>
    %77 = math.exp %76 : vector<128x128xf32>
    %cst_50 = arith.constant 1.000000e+00 : f32
    %78 = vector.broadcast %cst_50 : f32 to vector<128x128xf32>
    %79 = arith.addf %78, %77 : vector<128x128xf32>
    %80 = arith.divf %78, %79 : vector<128x128xf32>
    %c0_51 = arith.constant 0 : index
    %c0_52 = arith.constant 0 : index
    %81 = vector.load %arg14[%c0_51, %c0_52] : memref<128x128xf32, #tpu.memory_space<vmem>>, vector<128x128xf32>
    tpu.vector_store %arg14[%c0_51, %c0_52], %80 {strides = array<i32>} : memref<128x128xf32, #tpu.memory_space<vmem>>, vector<128x128xf32>,
    return
  }
  func.func @transform_0(%arg0: i32) -> (i32, i32) {
    %c0_i32 = arith.constant 0 : i32
    %c0_i32_0 = arith.constant 0 : i32
    return %arg0, %c0_i32 : i32, i32
  }
  func.func @transform_1(%arg0: i32) -> (i32, i32) {
    %c0_i32 = arith.constant 0 : i32
    %c0_i32_0 = arith.constant 0 : i32
    %c0_i32_1 = arith.constant 0 : i32
    return %c0_i32, %c0_i32_0 : i32, i32
  }
  func.func @transform_2(%arg0: i32) -> (i32, i32) {
    %c0_i32 = arith.constant 0 : i32
    %c0_i32_0 = arith.constant 0 : i32
    %c0_i32_1 = arith.constant 0 : i32
    return %c0_i32, %c0_i32_0 : i32, i32
  }
  func.func @transform_3(%arg0: i32) -> (i32, i32) {
    %c0_i32 = arith.constant 0 : i32
    %c0_i32_0 = arith.constant 0 : i32
    %c0_i32_1 = arith.constant 0 : i32
    return %c0_i32, %c0_i32_0 : i32, i32
  }
  func.func @transform_4(%arg0: i32) -> (i32, i32) {
    %c0_i32 = arith.constant 0 : i32
    %c0_i32_0 = arith.constant 0 : i32
    %c0_i32_1 = arith.constant 0 : i32
    return %c0_i32, %c0_i32_0 : i32, i32
  }
  func.func @transform_5(%arg0: i32) -> (i32, i32, i32) {
    %c0_i32 = arith.constant 0 : i32
    %c0_i32_0 = arith.constant 0 : i32
    %c0_i32_1 = arith.constant 0 : i32
    %c0_i32_2 = arith.constant 0 : i32
    return %c0_i32, %c0_i32_0, %c0_i32_1 : i32, i32, i32
  }
  func.func @transform_6(%arg0: i32) -> (i32, i32, i32) {
    %c0_i32 = arith.constant 0 : i32
    %c0_i32_0 = arith.constant 0 : i32
    %c0_i32_1 = arith.constant 0 : i32
    %c0_i32_2 = arith.constant 0 : i32
    return %c0_i32, %c0_i32_0, %c0_i32_1 : i32, i32, i32
  }
  func.func @transform_7(%arg0: i32) -> (i32, i32) {
    %c0_i32 = arith.constant 0 : i32
    %c0_i32_0 = arith.constant 0 : i32
    %c0_i32_1 = arith.constant 0 : i32
    return %c0_i32, %c0_i32_0 : i32, i32
  }
  func.func @transform_8(%arg0: i32) -> (i32, i32) {
    %c0_i32 = arith.constant 0 : i32
    %c0_i32_0 = arith.constant 0 : i32
    %c0_i32_1 = arith.constant 0 : i32
    return %c0_i32, %c0_i32_0 : i32, i32
  }
  func.func @transform_9(%arg0: i32) -> (i32, i32) {
    %c0_i32 = arith.constant 0 : i32
    %c0_i32_0 = arith.constant 0 : i32
    %c0_i32_1 = arith.constant 0 : i32
    return %c0_i32, %c0_i32_0 : i32, i32
  }
  func.func @transform_10(%arg0: i32) -> (i32, i32) {
    %c0_i32 = arith.constant 0 : i32
    %c0_i32_0 = arith.constant 0 : i32
    %c0_i32_1 = arith.constant 0 : i32
    return %c0_i32, %c0_i32_0 : i32, i32
  }
  func.func @transform_11(%arg0: i32) -> (i32, i32) {
    %c0_i32 = arith.constant 0 : i32
    %c0_i32_0 = arith.constant 0 : i32
    %c0_i32_1 = arith.constant 0 : i32
    return %c0_i32, %c0_i32_0 : i32, i32
  }
  func.func @transform_12(%arg0: i32) -> (i32, i32) {
    %c0_i32 = arith.constant 0 : i32
    %c0_i32_0 = arith.constant 0 : i32
    %c0_i32_1 = arith.constant 0 : i32
    return %c0_i32, %c0_i32_0 : i32, i32
  }
  func.func @transform_13(%arg0: i32) -> (i32, i32) {
    %c0_i32 = arith.constant 0 : i32
    %c0_i32_0 = arith.constant 0 : i32
    return %arg0, %c0_i32 : i32, i32
  }
}

</mosaic_0001>

<llo_original>
// kernel: tpu_custom_call.1
$region0: #{tpu_custom_call.1}
  #allocation0 [shape = 'u32[]', space=smem, size = 0x4, offset = 0x4, fixed_abs, tag = 'smem constant byte address 0x4 - core index']
  #allocation1 [shape = 'u32[144,128]{1,0:T(1,128)}', space=vmem, size = 0x12000, scoped, tag = 'internal scratch']
  %s0 = inlined_call_operand.hbm [shape: bf16[256,128], index: 0, kind: input, shape index: {}]
  %s1 = inlined_call_operand.hbm [shape: bf16[128,256], index: 1, kind: input, shape index: {}]
  %s2 = inlined_call_operand.vmem [shape: f32[1,256], index: 2, kind: input, shape index: {}]
  %s3 = inlined_call_operand.hbm [shape: bf16[256,128], index: 3, kind: input, shape index: {}]
  %s4 = inlined_call_operand.vmem [shape: f32[1,128], index: 4, kind: input, shape index: {}]
  %s5 = inlined_call_operand.hbm [shape: bf16[2,128,128], index: 5, kind: input, shape index: {}]
  %s6 = inlined_call_operand.vmem [shape: f32[2,1,128], index: 6, kind: input, shape index: {}]
  %s7 = inlined_call_operand.hbm [shape: bf16[128,128], index: 7, kind: input, shape index: {}]
  %s8 = inlined_call_operand.vmem [shape: f32[1,128], index: 8, kind: input, shape index: {}]
  %s9 = inlined_call_operand.hbm [shape: bf16[128,128], index: 9, kind: input, shape index: {}]
  %s10 = inlined_call_operand.vmem [shape: f32[1,128], index: 10, kind: input, shape index: {}]
  %s11 = inlined_call_operand.hbm [shape: bf16[128,128], index: 11, kind: input, shape index: {}]
  %s12 = inlined_call_operand.vmem [shape: f32[1,128], index: 12, kind: input, shape index: {}]
  %s13 = inlined_call_operand.hbm [shape: f32[256,128], index: 13, kind: output, shape index: {}]
  %s14 = sld [smem:[#allocation0]]
  $region113: #{tpu_custom_call.1} parent=0
    _
  %s16 = ssub.s32 1, %s14
  %s17 = scalar_select 0, %s16, %s14
  $region1: #{tpu_custom_call.1} parent=0
    #allocation2 [shape = 'u8[65536]{0}', space=vmem, size = 0x10000, scoped, tag = 'input window, operand 0']
    #allocation3 [shape = 's32[2]{0}', space=sflag, size = 0x8, scoped, tag = 'scoped memory for tpu_custom_call.1']
    #allocation4 [shape = 's32[2]{0}', space=sflag, size = 0x8, scoped, tag = 'scoped memory for tpu_custom_call.1']
    #allocation5 [shape = 'u8[65536]{0}', space=vmem, size = 0x10000, scoped, tag = 'input window, operand 1, single buffered']
    #allocation6 [shape = 's32[1]{0}', space=sflag, size = 0x4, scoped, tag = 'scoped memory for tpu_custom_call.1']
    #allocation7 [shape = 'u8[65536]{0}', space=vmem, size = 0x10000, scoped, tag = 'input window, operand 3, single buffered']
    #allocation8 [shape = 'u8[65536]{0}', space=vmem, size = 0x10000, scoped, tag = 'input window, operand 5, single buffered']
    #allocation9 [shape = 's32[1]{0}', space=sflag, size = 0x4, scoped, tag = 'scoped memory for tpu_custom_call.1']
    #allocation10 [shape = 'u8[32768]{0}', space=vmem, size = 0x8000, scoped, tag = 'input window, operand 7, single buffered']
    #allocation11 [shape = 'u8[32768]{0}', space=vmem, size = 0x8000, scoped, tag = 'input window, operand 9, single buffered']
    #allocation12 [shape = 's32[1]{0}', space=sflag, size = 0x4, scoped, tag = 'scoped memory for tpu_custom_call.1']
    #allocation13 [shape = 'u8[32768]{0}', space=vmem, size = 0x8000, scoped, tag = 'input window, operand 11, single buffered']
    #allocation14 [shape = 'u8[131072]{0}', space=vmem, size = 0x20000, scoped, tag = 'output window, operand 0']
    %18 = vsyncpa [#allocation3], 0
    %s19 = scalar_lea.sflag [#allocation3], 1
    %20 = vsyncpa %s19, 0
    %21 = vsyncpa [#allocation6], 0
    %22 = vsyncpa [#allocation9], 0
    %23 = vsyncpa [#allocation12], 0
    %24 = vsyncpa [#allocation4], 0
    %s25 = scalar_lea.sflag [#allocation4], 1
    %26 = vsyncpa %s25, 0
    loop: start=0, step=1, limit=4
    $region2: #{tpu_custom_call.1} parent=1 // loop_pre_header
      _
    $region3: #{tpu_custom_call.1} parent=1 // loop_header
      %s28 = sphi 0, %s32
      %p29 = scmp.ge.s32.totalorder %s28, 4
      %s38 = sphi 0, %s40
      %s41 = sphi 0, %s38
      %s42 = sphi 0, %s41
      %s58 = sphi 0, %s42
      %s62 = sphi 0, %s62
      %s64 = sphi 0, %s62
      %s65 = sphi 0, %s64
      %s79 = sphi 0, %s65
      %s83 = sphi 0, %s83
      %s85 = sphi 0, %s83
      %s86 = sphi 0, %s85
      %s100 = sphi 0, %s86
      %s104 = sphi 0, %s104
      %s106 = sphi 0, %s104
      %s107 = sphi 0, %s106
      %s121 = sphi 0, %s107
      %s125 = sphi 0, %s125
      %s127 = sphi 0, %s125
      %s128 = sphi 0, %s127
      %s142 = sphi 0, %s128
      %s146 = sphi 0, %s146
      %s148 = sphi 0, %s146
      %s149 = sphi 0, %s148
      %s163 = sphi 0, %s149
      %s167 = sphi 0, %s167
      %s169 = sphi 0, %s167
      %s170 = sphi 0, %s169
      %s184 = sphi 0, %s170
      %s188 = sphi 0, %s188
      %s190 = sphi 0, %s188
      %s191 = sphi 0, %s190
      %s205 = sphi 0, %s191
      %s209 = sphi 0, %s209
      %s211 = sphi 0, %s209
      %s212 = sphi 0, %s211
      %s226 = sphi 0, %s212
      %s230 = sphi 0, %s230
      %s232 = sphi 0, %s230
      %s233 = sphi 0, %s232
      %s247 = sphi 0, %s233
      %s251 = sphi 0, %s251
      %s253 = sphi 0, %s251
      %s254 = sphi 0, %s253
      %s268 = sphi 0, %s254
      %s272 = sphi 0, %s272
      %s274 = sphi 0, %s272
      %s275 = sphi 0, %s274
      %s289 = sphi 0, %s275
      %s293 = sphi 0, %s293
      %s295 = sphi 0, %s293
      %s296 = sphi 0, %s295
      %s310 = sphi 0, %s296
      %s316 = sphi 0, %s318
      %s319 = sphi 0, %s316
      %s320 = sphi 0, %s319
      %s336 = sphi 0, %s320
    $region4: #{tpu_custom_call.1} parent=1 // loop_header_branch
      %31 = sbr.rel (%p29) target = $region8
    $region5: #{tpu_custom_call.1} parent=1 // loop_body
      %s33 = ssub.s32 %s28, 1
      %s34 = ssub.s32 %s28, 2
      %s35 = sadd.s32 %s28, 1
      %s36 = ssub.s32 %s28, %s35
      %p37 = scmp.eq.s32.totalorder %s36, 0
      %s39 = sadd.s32 %s38, 1
      %s40 = scalar_select %p37, %s38, %s39
      %p43 = pneg %p37
      %p44 = scmp.eq.s32.totalorder %s28, 1
      %p45 = por %p43, %p44
      %p46 = scmp.ne.s32.totalorder %s38, %s41
      %p47 = scmp.eq.s32.totalorder %s28, 0
      %p48 = por %p46, %p47
      %p49 = scmp.ne.s32.totalorder %s38, %s41
      %p50 = scmp.eq.s32.totalorder %s33, 1
      %p51 = por %p49, %p50
      %p52 = scmp.ne.s32.totalorder %s41, %s42
      %p53 = scmp.eq.s32.totalorder %s33, 0
      %p54 = por %p52, %p53
      %p55 = scmp.ne.s32.totalorder %s41, %s42
      %p56 = scmp.eq.s32.totalorder %s34, 1
      %p57 = por %p55, %p56
      %p59 = scmp.ne.s32.totalorder %s42, %s58
      %p60 = scmp.eq.s32.totalorder %s34, 0
      %p61 = por %p59, %p60
      %s63 = sadd.s32 %s62, 1
      %p66 = scmp.eq.s32.totalorder %s28, 1
      %p67 = scmp.ne.s32.totalorder %s62, %s64
      %p68 = scmp.eq.s32.totalorder %s28, 0
      %p69 = por %p67, %p68
      %p70 = scmp.ne.s32.totalorder %s62, %s64
      %p71 = scmp.eq.s32.totalorder %s33, 1
      %p72 = por %p70, %p71
      %p73 = scmp.ne.s32.totalorder %s64, %s65
      %p74 = scmp.eq.s32.totalorder %s33, 0
      %p75 = por %p73, %p74
      %p76 = scmp.ne.s32.totalorder %s64, %s65
      %p77 = scmp.eq.s32.totalorder %s34, 1
      %p78 = por %p76, %p77
      %p80 = scmp.ne.s32.totalorder %s65, %s79
      %p81 = scmp.eq.s32.totalorder %s34, 0
      %p82 = por %p80, %p81
      %s84 = sadd.s32 %s83, 1
      %p87 = scmp.eq.s32.totalorder %s28, 1
      %p88 = scmp.ne.s32.totalorder %s83, %s85
      %p89 = scmp.eq.s32.totalorder %s28, 0
      %p90 = por %p88, %p89
      %p91 = scmp.ne.s32.totalorder %s83, %s85
      %p92 = scmp.eq.s32.totalorder %s33, 1
      %p93 = por %p91, %p92
      %p94 = scmp.ne.s32.totalorder %s85, %s86
      %p95 = scmp.eq.s32.totalorder %s33, 0
      %p96 = por %p94, %p95
      %p97 = scmp.ne.s32.totalorder %s85, %s86
      %p98 = scmp.eq.s32.totalorder %s34, 1
      %p99 = por %p97, %p98
      %p101 = scmp.ne.s32.totalorder %s86, %s100
      %p102 = scmp.eq.s32.totalorder %s34, 0
      %p103 = por %p101, %p102
      %s105 = sadd.s32 %s104, 1
      %p108 = scmp.eq.s32.totalorder %s28, 1
      %p109 = scmp.ne.s32.totalorder %s104, %s106
      %p110 = scmp.eq.s32.totalorder %s28, 0
      %p111 = por %p109, %p110
      %p112 = scmp.ne.s32.totalorder %s104, %s106
      %p113 = scmp.eq.s32.totalorder %s33, 1
      %p114 = por %p112, %p113
      %p115 = scmp.ne.s32.totalorder %s106, %s107
      %p116 = scmp.eq.s32.totalorder %s33, 0
      %p117 = por %p115, %p116
      %p118 = scmp.ne.s32.totalorder %s106, %s107
      %p119 = scmp.eq.s32.totalorder %s34, 1
      %p120 = por %p118, %p119
      %p122 = scmp.ne.s32.totalorder %s107, %s121
      %p123 = scmp.eq.s32.totalorder %s34, 0
      %p124 = por %p122, %p123
      %s126 = sadd.s32 %s125, 1
      %p129 = scmp.eq.s32.totalorder %s28, 1
      %p130 = scmp.ne.s32.totalorder %s125, %s127
      %p131 = scmp.eq.s32.totalorder %s28, 0
      %p132 = por %p130, %p131
      %p133 = scmp.ne.s32.totalorder %s125, %s127
      %p134 = scmp.eq.s32.totalorder %s33, 1
      %p135 = por %p133, %p134
      %p136 = scmp.ne.s32.totalorder %s127, %s128
      %p137 = scmp.eq.s32.totalorder %s33, 0
      %p138 = por %p136, %p137
      %p139 = scmp.ne.s32.totalorder %s127, %s128
      %p140 = scmp.eq.s32.totalorder %s34, 1
      %p141 = por %p139, %p140
      %p143 = scmp.ne.s32.totalorder %s128, %s142
      %p144 = scmp.eq.s32.totalorder %s34, 0
      %p145 = por %p143, %p144
      %s147 = sadd.s32 %s146, 1
      %p150 = scmp.eq.s32.totalorder %s28, 1
      %p151 = scmp.ne.s32.totalorder %s146, %s148
      %p152 = scmp.eq.s32.totalorder %s28, 0
      %p153 = por %p151, %p152
      %p154 = scmp.ne.s32.totalorder %s146, %s148
      %p155 = scmp.eq.s32.totalorder %s33, 1
      %p156 = por %p154, %p155
      %p157 = scmp.ne.s32.totalorder %s148, %s149
      %p158 = scmp.eq.s32.totalorder %s33, 0
      %p159 = por %p157, %p158
      %p160 = scmp.ne.s32.totalorder %s148, %s149
      %p161 = scmp.eq.s32.totalorder %s34, 1
      %p162 = por %p160, %p161
      %p164 = scmp.ne.s32.totalorder %s149, %s163
      %p165 = scmp.eq.s32.totalorder %s34, 0
      %p166 = por %p164, %p165
      %s168 = sadd.s32 %s167, 1
      %p171 = scmp.eq.s32.totalorder %s28, 1
      %p172 = scmp.ne.s32.totalorder %s167, %s169
      %p173 = scmp.eq.s32.totalorder %s28, 0
      %p174 = por %p172, %p173
      %p175 = scmp.ne.s32.totalorder %s167, %s169
      %p176 = scmp.eq.s32.totalorder %s33, 1
      %p177 = por %p175, %p176
      %p178 = scmp.ne.s32.totalorder %s169, %s170
      %p179 = scmp.eq.s32.totalorder %s33, 0
      %p180 = por %p178, %p179
      %p181 = scmp.ne.s32.totalorder %s169, %s170
      %p182 = scmp.eq.s32.totalorder %s34, 1
      %p183 = por %p181, %p182
      %p185 = scmp.ne.s32.totalorder %s170, %s184
      %p186 = scmp.eq.s32.totalorder %s34, 0
      %p187 = por %p185, %p186
      %s189 = sadd.s32 %s188, 1
      %p192 = scmp.eq.s32.totalorder %s28, 1
      %p193 = scmp.ne.s32.totalorder %s188, %s190
      %p194 = scmp.eq.s32.totalorder %s28, 0
      %p195 = por %p193, %p194
      %p196 = scmp.ne.s32.totalorder %s188, %s190
      %p197 = scmp.eq.s32.totalorder %s33, 1
      %p198 = por %p196, %p197
      %p199 = scmp.ne.s32.totalorder %s190, %s191
      %p200 = scmp.eq.s32.totalorder %s33, 0
      %p201 = por %p199, %p200
      %p202 = scmp.ne.s32.totalorder %s190, %s191
      %p203 = scmp.eq.s32.totalorder %s34, 1
      %p204 = por %p202, %p203
      %p206 = scmp.ne.s32.totalorder %s191, %s205
      %p207 = scmp.eq.s32.totalorder %s34, 0
      %p208 = por %p206, %p207
      %s210 = sadd.s32 %s209, 1
      %p213 = scmp.eq.s32.totalorder %s28, 1
      %p214 = scmp.ne.s32.totalorder %s209, %s211
      %p215 = scmp.eq.s32.totalorder %s28, 0
      %p216 = por %p214, %p215
      %p217 = scmp.ne.s32.totalorder %s209, %s211
      %p218 = scmp.eq.s32.totalorder %s33, 1
      %p219 = por %p217, %p218
      %p220 = scmp.ne.s32.totalorder %s211, %s212
      %p221 = scmp.eq.s32.totalorder %s33, 0
      %p222 = por %p220, %p221
      %p223 = scmp.ne.s32.totalorder %s211, %s212
      %p224 = scmp.eq.s32.totalorder %s34, 1
      %p225 = por %p223, %p224
      %p227 = scmp.ne.s32.totalorder %s212, %s226
      %p228 = scmp.eq.s32.totalorder %s34, 0
      %p229 = por %p227, %p228
      %s231 = sadd.s32 %s230, 1
      %p234 = scmp.eq.s32.totalorder %s28, 1
      %p235 = scmp.ne.s32.totalorder %s230, %s232
      %p236 = scmp.eq.s32.totalorder %s28, 0
      %p237 = por %p235, %p236
      %p238 = scmp.ne.s32.totalorder %s230, %s232
      %p239 = scmp.eq.s32.totalorder %s33, 1
      %p240 = por %p238, %p239
      %p241 = scmp.ne.s32.totalorder %s232, %s233
      %p242 = scmp.eq.s32.totalorder %s33, 0
      %p243 = por %p241, %p242
      %p244 = scmp.ne.s32.totalorder %s232, %s233
      %p245 = scmp.eq.s32.totalorder %s34, 1
      %p246 = por %p244, %p245
      %p248 = scmp.ne.s32.totalorder %s233, %s247
      %p249 = scmp.eq.s32.totalorder %s34, 0
      %p250 = por %p248, %p249
      %s252 = sadd.s32 %s251, 1
      %p255 = scmp.eq.s32.totalorder %s28, 1
      %p256 = scmp.ne.s32.totalorder %s251, %s253
      %p257 = scmp.eq.s32.totalorder %s28, 0
      %p258 = por %p256, %p257
      %p259 = scmp.ne.s32.totalorder %s251, %s253
      %p260 = scmp.eq.s32.totalorder %s33, 1
      %p261 = por %p259, %p260
      %p262 = scmp.ne.s32.totalorder %s253, %s254
      %p263 = scmp.eq.s32.totalorder %s33, 0
      %p264 = por %p262, %p263
      %p265 = scmp.ne.s32.totalorder %s253, %s254
      %p266 = scmp.eq.s32.totalorder %s34, 1
      %p267 = por %p265, %p266
      %p269 = scmp.ne.s32.totalorder %s254, %s268
      %p270 = scmp.eq.s32.totalorder %s34, 0
      %p271 = por %p269, %p270
      %s273 = sadd.s32 %s272, 1
      %p276 = scmp.eq.s32.totalorder %s28, 1
      %p277 = scmp.ne.s32.totalorder %s272, %s274
      %p278 = scmp.eq.s32.totalorder %s28, 0
      %p279 = por %p277, %p278
      %p280 = scmp.ne.s32.totalorder %s272, %s274
      %p281 = scmp.eq.s32.totalorder %s33, 1
      %p282 = por %p280, %p281
      %p283 = scmp.ne.s32.totalorder %s274, %s275
      %p284 = scmp.eq.s32.totalorder %s33, 0
      %p285 = por %p283, %p284
      %p286 = scmp.ne.s32.totalorder %s274, %s275
      %p287 = scmp.eq.s32.totalorder %s34, 1
      %p288 = por %p286, %p287
      %p290 = scmp.ne.s32.totalorder %s275, %s289
      %p291 = scmp.eq.s32.totalorder %s34, 0
      %p292 = por %p290, %p291
      %s294 = sadd.s32 %s293, 1
      %p297 = scmp.eq.s32.totalorder %s28, 1
      %p298 = scmp.ne.s32.totalorder %s293, %s295
      %p299 = scmp.eq.s32.totalorder %s28, 0
      %p300 = por %p298, %p299
      %p301 = scmp.ne.s32.totalorder %s293, %s295
      %p302 = scmp.eq.s32.totalorder %s33, 1
      %p303 = por %p301, %p302
      %p304 = scmp.ne.s32.totalorder %s295, %s296
      %p305 = scmp.eq.s32.totalorder %s33, 0
      %p306 = por %p304, %p305
      %p307 = scmp.ne.s32.totalorder %s295, %s296
      %p308 = scmp.eq.s32.totalorder %s34, 1
      %p309 = por %p307, %p308
      %p311 = scmp.ne.s32.totalorder %s296, %s310
      %p312 = scmp.eq.s32.totalorder %s34, 0
      %p313 = por %p311, %p312
      %s314 = ssub.s32 %s28, %s35
      %p315 = scmp.eq.s32.totalorder %s314, 0
      %s317 = sadd.s32 %s316, 1
      %s318 = scalar_select %p315, %s316, %s317
      %p321 = pneg %p315
      %p322 = scmp.eq.s32.totalorder %s28, 1
      %p323 = por %p321, %p322
      %p324 = scmp.ne.s32.totalorder %s316, %s319
      %p325 = scmp.eq.s32.totalorder %s28, 0
      %p326 = por %p324, %p325
      %p327 = scmp.ne.s32.totalorder %s316, %s319
      %p328 = scmp.eq.s32.totalorder %s33, 1
      %p329 = por %p327, %p328
      %p330 = scmp.ne.s32.totalorder %s319, %s320
      %p331 = scmp.eq.s32.totalorder %s33, 0
      %p332 = por %p330, %p331
      %p333 = scmp.ne.s32.totalorder %s319, %s320
      %p334 = scmp.eq.s32.totalorder %s34, 1
      %p335 = por %p333, %p334
      %p337 = scmp.ne.s32.totalorder %s320, %s336
      %p338 = scmp.eq.s32.totalorder %s34, 0
      %p339 = por %p337, %p338
      %p340 = scmp.le.s32.totalorder 1, %s28
      %p341 = scmp.lt.s32.totalorder %s28, 3
      %p342 = pnand %p340, %p341
      %p343 = pneg %p342
      // Predicated region
      $region9: #{tpu_custom_call.1} parent=5 // pred_check
        _
      $region10: #{tpu_custom_call.1} parent=5 // pred_check_branch
        %345 = sbr.rel (%p342) target = $region12
      $region11: #{tpu_custom_call.1} parent=5 // pred_region
        %s346 = ssub.s32 %s28, 1
        // Predicated region
        $region13: #{tpu_custom_call.1} parent=11 // pred_check
          %p347 = pneg %p75
        $region14: #{tpu_custom_call.1} parent=11 // pred_check_branch
          %349 = sbr.rel (%p347) target = $region16
        $region15: #{tpu_custom_call.1} parent=11 // pred_region
          %s351 = ssub.s32 2048, 2048
          %352 = vsyncadd [#allocation6], %s351
          %s353 = sshll.u32 [#allocation5], 4
          %s354 = int_to_ptr.vmem [resolvable:$true] %s353
          %359 = dma.hbm_to_vmem [thread:$0]  %s1, 2048, %s354, [#allocation6], 128, 128, 8
        $region16: #{tpu_custom_call.1} parent=11 // pred_fallthru
          _
        // Predicated region
        $region17: #{tpu_custom_call.1} parent=11 // pred_check
          %p360 = pneg %p96
        $region18: #{tpu_custom_call.1} parent=11 // pred_check_branch
          %362 = sbr.rel (%p360) target = $region20
        $region19: #{tpu_custom_call.1} parent=11 // pred_region
          _
        $region20: #{tpu_custom_call.1} parent=11 // pred_fallthru
          _
        // Predicated region
        $region21: #{tpu_custom_call.1} parent=11 // pred_check
          %p363 = pneg %p117
        $region22: #{tpu_custom_call.1} parent=11 // pred_check_branch
          %365 = sbr.rel (%p363) target = $region24
        $region23: #{tpu_custom_call.1} parent=11 // pred_region
          %s367 = ssub.s32 2048, 2048
          %368 = vsyncadd [#allocation6], %s367
          %s369 = sshll.u32 [#allocation7], 4
          %s370 = int_to_ptr.vmem [resolvable:$true] %s369
          %375 = dma.hbm_to_vmem [thread:$0]  %s3, 2048, %s370, [#allocation6], 64, 64, 4
        $region24: #{tpu_custom_call.1} parent=11 // pred_fallthru
          _
        // Predicated region
        $region25: #{tpu_custom_call.1} parent=11 // pred_check
          %p376 = pneg %p138
        $region26: #{tpu_custom_call.1} parent=11 // pred_check_branch
          %378 = sbr.rel (%p376) target = $region28
        $region27: #{tpu_custom_call.1} parent=11 // pred_region
          _
        $region28: #{tpu_custom_call.1} parent=11 // pred_fallthru
          _
        // Predicated region
        $region29: #{tpu_custom_call.1} parent=11 // pred_check
          %p379 = pneg %p159
        $region30: #{tpu_custom_call.1} parent=11 // pred_check_branch
          %381 = sbr.rel (%p379) target = $region32
        $region31: #{tpu_custom_call.1} parent=11 // pred_region
          %s383 = ssub.s32 2048, 2048
          %384 = vsyncadd [#allocation9], %s383
          %s385 = sshll.u32 [#allocation8], 4
          %s386 = int_to_ptr.vmem [resolvable:$true] %s385
          %391 = dma.hbm_to_vmem [thread:$0]  %s5, 2048, %s386, [#allocation9], 64, 64, 4
        $region32: #{tpu_custom_call.1} parent=11 // pred_fallthru
          _
        // Predicated region
        $region33: #{tpu_custom_call.1} parent=11 // pred_check
          %p392 = pneg %p180
        $region34: #{tpu_custom_call.1} parent=11 // pred_check_branch
          %394 = sbr.rel (%p392) target = $region36
        $region35: #{tpu_custom_call.1} parent=11 // pred_region
          _
        $region36: #{tpu_custom_call.1} parent=11 // pred_fallthru
          _
        // Predicated region
        $region37: #{tpu_custom_call.1} parent=11 // pred_check
          %p395 = pneg %p201
        $region38: #{tpu_custom_call.1} parent=11 // pred_check_branch
          %397 = sbr.rel (%p395) target = $region40
        $region39: #{tpu_custom_call.1} parent=11 // pred_region
          %s399 = ssub.s32 1024, 1024
          %400 = vsyncadd [#allocation9], %s399
          %s401 = sshll.u32 [#allocation10], 4
          %s402 = int_to_ptr.vmem [resolvable:$true] %s401
          %407 = dma.hbm_to_vmem [thread:$0]  %s7, 1024, %s402, [#allocation9], 64, 64, 4
        $region40: #{tpu_custom_call.1} parent=11 // pred_fallthru
          _
        // Predicated region
        $region41: #{tpu_custom_call.1} parent=11 // pred_check
          %p408 = pneg %p222
        $region42: #{tpu_custom_call.1} parent=11 // pred_check_branch
          %410 = sbr.rel (%p408) target = $region44
        $region43: #{tpu_custom_call.1} parent=11 // pred_region
          _
        $region44: #{tpu_custom_call.1} parent=11 // pred_fallthru
          _
        // Predicated region
        $region45: #{tpu_custom_call.1} parent=11 // pred_check
          %p411 = pneg %p243
        $region46: #{tpu_custom_call.1} parent=11 // pred_check_branch
          %413 = sbr.rel (%p411) target = $region48
        $region47: #{tpu_custom_call.1} parent=11 // pred_region
          %s415 = ssub.s32 1024, 1024
          %416 = vsyncadd [#allocation12], %s415
          %s417 = sshll.u32 [#allocation11], 4
          %s418 = int_to_ptr.vmem [resolvable:$true] %s417
          %423 = dma.hbm_to_vmem [thread:$0]  %s9, 1024, %s418, [#allocation12], 64, 64, 4
        $region48: #{tpu_custom_call.1} parent=11 // pred_fallthru
          _
        // Predicated region
        $region49: #{tpu_custom_call.1} parent=11 // pred_check
          %p424 = pneg %p264
        $region50: #{tpu_custom_call.1} parent=11 // pred_check_branch
          %426 = sbr.rel (%p424) target = $region52
        $region51: #{tpu_custom_call.1} parent=11 // pred_region
          _
        $region52: #{tpu_custom_call.1} parent=11 // pred_fallthru
          _
        // Predicated region
        $region53: #{tpu_custom_call.1} parent=11 // pred_check
          %p427 = pneg %p285
        $region54: #{tpu_custom_call.1} parent=11 // pred_check_branch
          %429 = sbr.rel (%p427) target = $region56
        $region55: #{tpu_custom_call.1} parent=11 // pred_region
          %s431 = ssub.s32 1024, 1024
          %432 = vsyncadd [#allocation12], %s431
          %s433 = sshll.u32 [#allocation13], 4
          %s434 = int_to_ptr.vmem [resolvable:$true] %s433
          %439 = dma.hbm_to_vmem [thread:$0]  %s11, 1024, %s434, [#allocation12], 64, 64, 4
        $region56: #{tpu_custom_call.1} parent=11 // pred_fallthru
          _
        // Predicated region
        $region57: #{tpu_custom_call.1} parent=11 // pred_check
          %p440 = pneg %p306
        $region58: #{tpu_custom_call.1} parent=11 // pred_check_branch
          %442 = sbr.rel (%p440) target = $region60
        $region59: #{tpu_custom_call.1} parent=11 // pred_region
          _
        $region60: #{tpu_custom_call.1} parent=11 // pred_fallthru
          _
      $region12: #{tpu_custom_call.1} parent=5 // pred_fallthru
        _
      %p443 = scmp.lt.s32.totalorder %s28, 2
      // Predicated region
      $region61: #{tpu_custom_call.1} parent=5 // pred_check
        %p444 = pneg %p443
      $region62: #{tpu_custom_call.1} parent=5 // pred_check_branch
        %446 = sbr.rel (%p444) target = $region64
      $region63: #{tpu_custom_call.1} parent=5 // pred_region
        // Predicated region
        $region65: #{tpu_custom_call.1} parent=63 // pred_check
          %p447 = pneg %p48
        $region66: #{tpu_custom_call.1} parent=63 // pred_check_branch
          %449 = sbr.rel (%p447) target = $region68
        $region67: #{tpu_custom_call.1} parent=63 // pred_region
          %s450 = sand.u32 %s38, 1
          %s451 = scalar_lea.sflag [#allocation3], %s450
          %s452 = sand.u32 %s38, 1
          %s453 = smul.addr %s452, 64
          %s454 = scalar_lea.vmem [#allocation2], %s453
          %s455 = smul.u32 16, %s28
          %s457 = ssub.s32 1024, 1024
          %458 = vsyncadd %s451, %s457
          %s459 = smul.addr %s455, 64
          %s460 = scalar_lea.hbm %s0, %s459
          %s461 = sshll.u32 %s454, 4
          %s462 = int_to_ptr.vmem [resolvable:$true] %s461
          %467 = dma.hbm_to_vmem [thread:$0]  %s460, 1024, %s462, %s451, 64, 64, 4
        $region68: #{tpu_custom_call.1} parent=63 // pred_fallthru
          _
      $region64: #{tpu_custom_call.1} parent=5 // pred_fallthru
        _
      %p468 = scmp.le.s32.totalorder 1, %s28
      %p469 = scmp.lt.s32.totalorder %s28, 3
      %p470 = pnand %p468, %p469
      %p471 = pneg %p470
      // Predicated region
      $region69: #{tpu_custom_call.1} parent=5 // pred_check
        _
      $region70: #{tpu_custom_call.1} parent=5 // pred_check_branch
        %473 = sbr.rel (%p470) target = $region72
      $region71: #{tpu_custom_call.1} parent=5 // pred_region
        %s474 = ssub.s32 %s28, 1
        %s475 = sand.u32 %s41, 1
        %s476 = scalar_lea.sflag [#allocation3], %s475
        %s477 = sand.u32 %s41, 1
        %s478 = smul.addr %s477, 64
        %s479 = scalar_lea.vmem [#allocation2], %s478
        // Predicated region
        $region73: #{tpu_custom_call.1} parent=71 // pred_check
          %p480 = pneg %p54
        $region74: #{tpu_custom_call.1} parent=71 // pred_check_branch
          %482 = sbr.rel (%p480) target = $region76
        $region75: #{tpu_custom_call.1} parent=71 // pred_region
          %483 = dma.done %s476, 1024
        $region76: #{tpu_custom_call.1} parent=71 // pred_fallthru
          _
        // Predicated region
        $region77: #{tpu_custom_call.1} parent=71 // pred_check
          %p484 = pneg %p75
        $region78: #{tpu_custom_call.1} parent=71 // pred_check_branch
          %486 = sbr.rel (%p484) target = $region80
        $region79: #{tpu_custom_call.1} parent=71 // pred_region
          %487 = dma.done [#allocation6], 2048
        $region80: #{tpu_custom_call.1} parent=71 // pred_fallthru
          _
        // Predicated region
        $region81: #{tpu_custom_call.1} parent=71 // pred_check
          %p488 = pneg %p117
        $region82: #{tpu_custom_call.1} parent=71 // pred_check_branch
          %490 = sbr.rel (%p488) target = $region84
        $region83: #{tpu_custom_call.1} parent=71 // pred_region
          %491 = dma.done [#allocation6], 2048
        $region84: #{tpu_custom_call.1} parent=71 // pred_fallthru
          _
        // Predicated region
        $region85: #{tpu_custom_call.1} parent=71 // pred_check
          %p492 = pneg %p159
        $region86: #{tpu_custom_call.1} parent=71 // pred_check_branch
          %494 = sbr.rel (%p492) target = $region88
        $region87: #{tpu_custom_call.1} parent=71 // pred_region
          %495 = dma.done [#allocation9], 2048
        $region88: #{tpu_custom_call.1} parent=71 // pred_fallthru
          _
        // Predicated region
        $region89: #{tpu_custom_call.1} parent=71 // pred_check
          %p496 = pneg %p201
        $region90: #{tpu_custom_call.1} parent=71 // pred_check_branch
          %498 = sbr.rel (%p496) target = $region92
        $region91: #{tpu_custom_call.1} parent=71 // pred_region
          %499 = dma.done [#allocation9], 1024
        $region92: #{tpu_custom_call.1} parent=71 // pred_fallthru
          _
        // Predicated region
        $region93: #{tpu_custom_call.1} parent=71 // pred_check
          %p500 = pneg %p243
        $region94: #{tpu_custom_call.1} parent=71 // pred_check_branch
          %502 = sbr.rel (%p500) target = $region96
        $region95: #{tpu_custom_call.1} parent=71 // pred_region
          %503 = dma.done [#allocation12], 1024
        $region96: #{tpu_custom_call.1} parent=71 // pred_fallthru
          _
        // Predicated region
        $region97: #{tpu_custom_call.1} parent=71 // pred_check
          %p504 = pneg %p285
        $region98: #{tpu_custom_call.1} parent=71 // pred_check_branch
          %506 = sbr.rel (%p504) target = $region100
        $region99: #{tpu_custom_call.1} parent=71 // pred_region
          %507 = dma.done [#allocation12], 1024
        $region100: #{tpu_custom_call.1} parent=71 // pred_fallthru
          _
        %s508 = sand.u32 %s41, 1
        %s509 = scalar_lea.sflag [#allocation3], %s508
        %s510 = sand.u32 %s41, 1
        %s511 = smul.addr %s510, 64
        %s512 = scalar_lea.vmem [#allocation2], %s511
        %p513 = pneg %p54
        %p514 = pneg %p51
        %p515 = pneg %p75
        %p516 = pneg %p72
        %p517 = pneg %p96
        %p518 = pneg %p93
        %p519 = pneg %p117
        %p520 = pneg %p114
        %p521 = pneg %p138
        %p522 = pneg %p135
        %p523 = pneg %p159
        %p524 = pneg %p156
        %p525 = pneg %p180
        %p526 = pneg %p177
        %p527 = pneg %p201
        %p528 = pneg %p198
        %p529 = pneg %p222
        %p530 = pneg %p219
        %p531 = pneg %p243
        %p532 = pneg %p240
        %p533 = pneg %p264
        %p534 = pneg %p261
        %p535 = pneg %p285
        %p536 = pneg %p282
        %p537 = pneg %p306
        %p538 = pneg %p303
        %p539 = pneg %p332
        %p540 = pneg %p329
        %s541 = sand.u32 %s319, 1
        %s542 = scalar_lea.sflag [#allocation4], %s541
        %s543 = sand.u32 %s319, 1
        %s544 = smul.addr %s543, 128
        %s545 = scalar_lea.vmem [#allocation14], %s544
        %s546 = smul.u32 16, %s33
        %s547 = smul.u32 16, %s33
        %v549 = vld [vmem:[%s479] sm:$0xf]
        %v550 = vld [vmem:[%s479 + $0x4] sm:$0xf]
        %v551 = vld [vmem:[%s479 + $0x8] sm:$0xf]
        %v552 = vld [vmem:[%s479 + $0xc] sm:$0xf]
        %v553 = vld [vmem:[%s479 + $0x10] sm:$0xf]
        %v554 = vld [vmem:[%s479 + $0x14] sm:$0xf]
        %v555 = vld [vmem:[%s479 + $0x18] sm:$0xf]
        %v556 = vld [vmem:[%s479 + $0x1c] sm:$0xf]
        %v557 = vld [vmem:[%s479 + $0x20] sm:$0xf]
        %v558 = vld [vmem:[%s479 + $0x24] sm:$0xf]
        %v559 = vld [vmem:[%s479 + $0x28] sm:$0xf]
        %v560 = vld [vmem:[%s479 + $0x2c] sm:$0xf]
        %v561 = vld [vmem:[%s479 + $0x30] sm:$0xf]
        %v562 = vld [vmem:[%s479 + $0x34] sm:$0xf]
        %v563 = vld [vmem:[%s479 + $0x38] sm:$0xf]
        %v564 = vld [vmem:[%s479 + $0x3c] sm:$0xf]
        %v565 = vld [vmem:[#allocation5] sm:$0xff]
        %v566 = vld [vmem:[#allocation5 + $0x8] sm:$0xff]
        %v567 = vld [vmem:[#allocation5 + $0x10] sm:$0xff]
        %v568 = vld [vmem:[#allocation5 + $0x18] sm:$0xff]
        %v569 = vld [vmem:[#allocation5 + $0x20] sm:$0xff]
        %v570 = vld [vmem:[#allocation5 + $0x28] sm:$0xff]
        %v571 = vld [vmem:[#allocation5 + $0x30] sm:$0xff]
        %v572 = vld [vmem:[#allocation5 + $0x38] sm:$0xff]
        %v573 = vld [vmem:[#allocation5 + $0x40] sm:$0xff]
        %v574 = vld [vmem:[#allocation5 + $0x48] sm:$0xff]
        %v575 = vld [vmem:[#allocation5 + $0x50] sm:$0xff]
        %v576 = vld [vmem:[#allocation5 + $0x58] sm:$0xff]
        %v577 = vld [vmem:[#allocation5 + $0x60] sm:$0xff]
        %v578 = vld [vmem:[#allocation5 + $0x68] sm:$0xff]
        %v579 = vld [vmem:[#allocation5 + $0x70] sm:$0xff]
        %v580 = vld [vmem:[#allocation5 + $0x78] sm:$0xff]
        %v581 = vld [vmem:[%s2] sm:$0x3]
        %v583 = vlaneseq
        %v584 = vshrl.u32 %v583, 7
        %v585 = vsub.s32 0, %v584
        %v586 = vrot.slane %v581, %v585
        %v587 = vlaneseq
        %v588 = vshrl.u32 %v587, 7
        %v589 = vsub.s32 1, %v588
        %v590 = vrot.slane %v581, %v589
        %v609 = vunpack.c.l.b16 %v549
        %v610 = vunpack.c.l.b16 %v550
        %v611 = vunpack.c.l.b16 %v551
        %v612 = vunpack.c.l.b16 %v552
        %v613 = vunpack.c.l.b16 %v553
        %v614 = vunpack.c.l.b16 %v554
        %v615 = vunpack.c.l.b16 %v555
        %v616 = vunpack.c.l.b16 %v556
        %v617 = vunpack.c.l.b16 %v557
        %v618 = vunpack.c.l.b16 %v558
        %v619 = vunpack.c.l.b16 %v559
        %v620 = vunpack.c.l.b16 %v560
        %v621 = vunpack.c.l.b16 %v561
        %v622 = vunpack.c.l.b16 %v562
        %v623 = vunpack.c.l.b16 %v563
        %v624 = vunpack.c.l.b16 %v564
        %v625 = vpack.c.b16 %v610, %v609
        %v626 = vpack.c.b16 %v612, %v611
        %v627 = vpack.c.b16 %v614, %v613
        %v628 = vpack.c.b16 %v616, %v615
        %v629 = vpack.c.b16 %v618, %v617
        %v630 = vpack.c.b16 %v620, %v619
        %v631 = vpack.c.b16 %v622, %v621
        %v632 = vpack.c.b16 %v624, %v623
        %v657 = vunpack.c.l.b16 %v565
        %v658 = vunpack.c.h.b16 %v565
        %v659 = vunpack.c.l.b16 %v566
        %v660 = vunpack.c.h.b16 %v566
        %v661 = vunpack.c.l.b16 %v567
        %v662 = vunpack.c.h.b16 %v567
        %v663 = vunpack.c.l.b16 %v568
        %v664 = vunpack.c.h.b16 %v568
        %v665 = vunpack.c.l.b16 %v569
        %v666 = vunpack.c.h.b16 %v569
        %v667 = vunpack.c.l.b16 %v570
        %v668 = vunpack.c.h.b16 %v570
        %v669 = vunpack.c.l.b16 %v571
        %v670 = vunpack.c.h.b16 %v571
        %v671 = vunpack.c.l.b16 %v572
        %v672 = vunpack.c.h.b16 %v572
        %v673 = vunpack.c.l.b16 %v573
        %v674 = vunpack.c.h.b16 %v573
        %v675 = vunpack.c.l.b16 %v574
        %v676 = vunpack.c.h.b16 %v574
        %v677 = vunpack.c.l.b16 %v575
        %v678 = vunpack.c.h.b16 %v575
        %v679 = vunpack.c.l.b16 %v576
        %v680 = vunpack.c.h.b16 %v576
        %v681 = vunpack.c.l.b16 %v577
        %v682 = vunpack.c.h.b16 %v577
        %v683 = vunpack.c.l.b16 %v578
        %v684 = vunpack.c.h.b16 %v578
        %v685 = vunpack.c.l.b16 %v579
        %v686 = vunpack.c.h.b16 %v579
        %v687 = vunpack.c.l.b16 %v580
        %v688 = vunpack.c.h.b16 %v580
        %v689 = vpack.c.b16 %v659, %v657
        %v690 = vpack.c.b16 %v660, %v658
        %v691 = vpack.c.b16 %v663, %v661
        %v692 = vpack.c.b16 %v664, %v662
        %v693 = vpack.c.b16 %v667, %v665
        %v694 = vpack.c.b16 %v668, %v666
        %v695 = vpack.c.b16 %v671, %v669
        %v696 = vpack.c.b16 %v672, %v670
        %v697 = vpack.c.b16 %v675, %v673
        %v698 = vpack.c.b16 %v676, %v674
        %v699 = vpack.c.b16 %v679, %v677
        %v700 = vpack.c.b16 %v680, %v678
        %v701 = vpack.c.b16 %v683, %v681
        %v702 = vpack.c.b16 %v684, %v682
        %v703 = vpack.c.b16 %v687, %v685
        %v704 = vpack.c.b16 %v688, %v686
        %721 = vmatprep.subr.bf16.mxu0 %v690
        %722 = vmatpush1.bf16.msra.mxu0 %v689
        %723 = vmatprep.subr.bf16.mxu0 %v692
        %724 = vmatpush1.bf16.msra.mxu0 %v691
        %725 = vmatprep.subr.bf16.mxu0 %v694
        %726 = vmatpush1.bf16.msra.mxu0 %v693
        %727 = vmatprep.subr.bf16.mxu0 %v696
        %728 = vmatpush1.bf16.msra.mxu0 %v695
        %729 = vmatprep.subr.bf16.mxu0 %v698
        %730 = vmatpush1.bf16.msra.mxu0 %v697
        %731 = vmatprep.subr.bf16.mxu0 %v700
        %732 = vmatpush1.bf16.msra.mxu0 %v699
        %733 = vmatprep.subr.bf16.mxu0 %v702
        %734 = vmatpush1.bf16.msra.mxu0 %v701
        %735 = vmatprep.subr.bf16.mxu0 %v704
        %736 = vmatpush1.bf16.msra.mxu0 %v703
        %737 = vmatprep.subr.bf16.mxu0 0
        %738 = vmatpush1.bf16.msra.mxu0 0
        %739 = vmatprep.subr.bf16.mxu0 0
        %740 = vmatpush1.bf16.msra.mxu0 0
        %741 = vmatprep.subr.bf16.mxu0 0
        %742 = vmatpush1.bf16.msra.mxu0 0
        %743 = vmatprep.subr.bf16.mxu0 0
        %744 = vmatpush1.bf16.msra.mxu0 0
        %745 = vmatprep.subr.bf16.mxu0 0
        %746 = vmatpush1.bf16.msra.mxu0 0
        %747 = vmatprep.subr.bf16.mxu0 0
        %748 = vmatpush1.bf16.msra.mxu0 0
        %749 = vmatprep.subr.bf16.mxu0 0
        %750 = vmatpush1.bf16.msra.mxu0 0
        %751 = vmatprep.subr.bf16.mxu0 0
        %752 = vmatpush1.bf16.msra.mxu0 0
        %753 = vmatprep.mubr.bf16.mxu0 0
        %754 = vmatmul.mubr.bf16.gmra.mrb[0].mxu0 %v625
        %v755 = vpop.f32.mrb[0].mxu0
        %v756 = vadd.f32 %v586, %v755
        %v757 = vpop.f32.mrb[0].mxu0
        %v758 = vadd.f32 %v590, %v757
        %v759 = vpop.f32.mrb[0].mxu0
        %v760 = vadd.f32 %v586, %v759
        %v761 = vpop.f32.mrb[0].mxu0
        %v762 = vadd.f32 %v590, %v761
        %763 = vmatprep.mubr.bf16.mxu0 0
        %764 = vmatmul.mubr.bf16.gmra.mrb[0].mxu0 %v626
        %v765 = vpop.f32.mrb[0].mxu0
        %v766 = vadd.f32 %v586, %v765
        %v767 = vpop.f32.mrb[0].mxu0
        %v768 = vadd.f32 %v590, %v767
        %v769 = vpop.f32.mrb[0].mxu0
        %v770 = vadd.f32 %v586, %v769
        %v771 = vpop.f32.mrb[0].mxu0
        %v772 = vadd.f32 %v590, %v771
        %773 = vmatprep.mubr.bf16.mxu0 0
        %774 = vmatmul.mubr.bf16.gmra.mrb[0].mxu0 %v627
        %v775 = vpop.f32.mrb[0].mxu0
        %v776 = vadd.f32 %v586, %v775
        %v777 = vpop.f32.mrb[0].mxu0
        %v778 = vadd.f32 %v590, %v777
        %v779 = vpop.f32.mrb[0].mxu0
        %v780 = vadd.f32 %v586, %v779
        %v781 = vpop.f32.mrb[0].mxu0
        %v782 = vadd.f32 %v590, %v781
        %783 = vmatprep.mubr.bf16.mxu0 0
        %784 = vmatmul.mubr.bf16.gmra.mrb[0].mxu0 %v628
        %v785 = vpop.f32.mrb[0].mxu0
        %v786 = vadd.f32 %v586, %v785
        %v787 = vpop.f32.mrb[0].mxu0
        %v788 = vadd.f32 %v590, %v787
        %v789 = vpop.f32.mrb[0].mxu0
        %v790 = vadd.f32 %v586, %v789
        %v791 = vpop.f32.mrb[0].mxu0
        %v792 = vadd.f32 %v590, %v791
        %793 = vmatprep.mubr.bf16.mxu0 0
        %794 = vmatmul.mubr.bf16.gmra.mrb[0].mxu0 %v629
        %v795 = vpop.f32.mrb[0].mxu0
        %v796 = vadd.f32 %v586, %v795
        %v797 = vpop.f32.mrb[0].mxu0
        %v798 = vadd.f32 %v590, %v797
        %v799 = vpop.f32.mrb[0].mxu0
        %v800 = vadd.f32 %v586, %v799
        %v801 = vpop.f32.mrb[0].mxu0
        %v802 = vadd.f32 %v590, %v801
        %803 = vmatprep.mubr.bf16.mxu0 0
        %804 = vmatmul.mubr.bf16.gmra.mrb[0].mxu0 %v630
        %v805 = vpop.f32.mrb[0].mxu0
        %v806 = vadd.f32 %v586, %v805
        %v807 = vpop.f32.mrb[0].mxu0
        %v808 = vadd.f32 %v590, %v807
        %v809 = vpop.f32.mrb[0].mxu0
        %v810 = vadd.f32 %v586, %v809
        %v811 = vpop.f32.mrb[0].mxu0
        %v812 = vadd.f32 %v590, %v811
        %813 = vmatprep.mubr.bf16.mxu0 0
        %814 = vmatmul.mubr.bf16.gmra.mrb[0].mxu0 %v631
        %v815 = vpop.f32.mrb[0].mxu0
        %v816 = vadd.f32 %v586, %v815
        %v817 = vpop.f32.mrb[0].mxu0
        %v818 = vadd.f32 %v590, %v817
        %v819 = vpop.f32.mrb[0].mxu0
        %v820 = vadd.f32 %v586, %v819
        %v821 = vpop.f32.mrb[0].mxu0
        %v822 = vadd.f32 %v590, %v821
        %823 = vmatprep.mubr.bf16.mxu0 0
        %824 = vmatmul.mubr.bf16.gmra.mrb[0].mxu0 %v632
        %v825 = vpop.f32.mrb[0].mxu0
        %v826 = vadd.f32 %v586, %v825
        %v827 = vpop.f32.mrb[0].mxu0
        %v828 = vadd.f32 %v590, %v827
        %v829 = vpop.f32.mrb[0].mxu0
        %v830 = vadd.f32 %v586, %v829
        %v831 = vpop.f32.mrb[0].mxu0
        %v832 = vadd.f32 %v590, %v831
        %833 = vdwg.mxu0
        %vm834 = vcmp.gt.f32.partialorder %v756, 0.0
        %vm835 = vcmp.gt.f32.partialorder %v758, 0.0
        %vm836 = vcmp.gt.f32.partialorder %v760, 0.0
        %vm837 = vcmp.gt.f32.partialorder %v762, 0.0
        %vm838 = vcmp.gt.f32.partialorder %v766, 0.0
        %vm839 = vcmp.gt.f32.partialorder %v768, 0.0
        %vm840 = vcmp.gt.f32.partialorder %v770, 0.0
        %vm841 = vcmp.gt.f32.partialorder %v772, 0.0
        %vm842 = vcmp.gt.f32.partialorder %v776, 0.0
        %vm843 = vcmp.gt.f32.partialorder %v778, 0.0
        %vm844 = vcmp.gt.f32.partialorder %v780, 0.0
        %vm845 = vcmp.gt.f32.partialorder %v782, 0.0
        %vm846 = vcmp.gt.f32.partialorder %v786, 0.0
        %vm847 = vcmp.gt.f32.partialorder %v788, 0.0
        %vm848 = vcmp.gt.f32.partialorder %v790, 0.0
        %vm849 = vcmp.gt.f32.partialorder %v792, 0.0
        %vm850 = vcmp.gt.f32.partialorder %v796, 0.0
        %vm851 = vcmp.gt.f32.partialorder %v798, 0.0
        %vm852 = vcmp.gt.f32.partialorder %v800, 0.0
        %vm853 = vcmp.gt.f32.partialorder %v802, 0.0
        %vm854 = vcmp.gt.f32.partialorder %v806, 0.0
        %vm855 = vcmp.gt.f32.partialorder %v808, 0.0
        %vm856 = vcmp.gt.f32.partialorder %v810, 0.0
        %vm857 = vcmp.gt.f32.partialorder %v812, 0.0
        %vm858 = vcmp.gt.f32.partialorder %v816, 0.0
        %vm859 = vcmp.gt.f32.partialorder %v818, 0.0
        %vm860 = vcmp.gt.f32.partialorder %v820, 0.0
        %vm861 = vcmp.gt.f32.partialorder %v822, 0.0
        %vm862 = vcmp.gt.f32.partialorder %v826, 0.0
        %vm863 = vcmp.gt.f32.partialorder %v828, 0.0
        %vm864 = vcmp.gt.f32.partialorder %v830, 0.0
        %vm865 = vcmp.gt.f32.partialorder %v832, 0.0
        %v866 = vmul.f32 %v756, 0.01
        %v867 = vmul.f32 %v758, 0.01
        %v868 = vmul.f32 %v760, 0.01
        %v869 = vmul.f32 %v762, 0.01
        %v870 = vmul.f32 %v766, 0.01
        %v871 = vmul.f32 %v768, 0.01
        %v872 = vmul.f32 %v770, 0.01
        %v873 = vmul.f32 %v772, 0.01
        %v874 = vmul.f32 %v776, 0.01
        %v875 = vmul.f32 %v778, 0.01
        %v876 = vmul.f32 %v780, 0.01
        %v877 = vmul.f32 %v782, 0.01
        %v878 = vmul.f32 %v786, 0.01
        %v879 = vmul.f32 %v788, 0.01
        %v880 = vmul.f32 %v790, 0.01
        %v881 = vmul.f32 %v792, 0.01
        %v882 = vmul.f32 %v796, 0.01
        %v883 = vmul.f32 %v798, 0.01
        %v884 = vmul.f32 %v800, 0.01
        %v885 = vmul.f32 %v802, 0.01
        %v886 = vmul.f32 %v806, 0.01
        %v887 = vmul.f32 %v808, 0.01
        %v888 = vmul.f32 %v810, 0.01
        %v889 = vmul.f32 %v812, 0.01
        %v890 = vmul.f32 %v816, 0.01
        %v891 = vmul.f32 %v818, 0.01
        %v892 = vmul.f32 %v820, 0.01
        %v893 = vmul.f32 %v822, 0.01
        %v894 = vmul.f32 %v826, 0.01
        %v895 = vmul.f32 %v828, 0.01
        %v896 = vmul.f32 %v830, 0.01
        %v897 = vmul.f32 %v832, 0.01
        %v898 = vsel %vm834, %v756, %v866
        %v899 = vsel %vm835, %v758, %v867
        %v900 = vsel %vm836, %v760, %v868
        %v901 = vsel %vm837, %v762, %v869
        %v902 = vsel %vm838, %v766, %v870
        %v903 = vsel %vm839, %v768, %v871
        %v904 = vsel %vm840, %v770, %v872
        %v905 = vsel %vm841, %v772, %v873
        %v906 = vsel %vm842, %v776, %v874
        %v907 = vsel %vm843, %v778, %v875
        %v908 = vsel %vm844, %v780, %v876
        %v909 = vsel %vm845, %v782, %v877
        %v910 = vsel %vm846, %v786, %v878
        %v911 = vsel %vm847, %v788, %v879
        %v912 = vsel %vm848, %v790, %v880
        %v913 = vsel %vm849, %v792, %v881
        %v914 = vsel %vm850, %v796, %v882
        %v915 = vsel %vm851, %v798, %v883
        %v916 = vsel %vm852, %v800, %v884
        %v917 = vsel %vm853, %v802, %v885
        %v918 = vsel %vm854, %v806, %v886
        %v919 = vsel %vm855, %v808, %v887
        %v920 = vsel %vm856, %v810, %v888
        %v921 = vsel %vm857, %v812, %v889
        %v922 = vsel %vm858, %v816, %v890
        %v923 = vsel %vm859, %v818, %v891
        %v924 = vsel %vm860, %v820, %v892
        %v925 = vsel %vm861, %v822, %v893
        %v926 = vsel %vm862, %v826, %v894
        %v927 = vsel %vm863, %v828, %v895
        %v928 = vsel %vm864, %v830, %v896
        %v929 = vsel %vm865, %v832, %v897
        %v930 = vpack.c.bf16 %v900, %v898
        %v931 = vpack.c.bf16 %v901, %v899
        %v932 = vpack.c.bf16 %v904, %v902
        %v933 = vpack.c.bf16 %v905, %v903
        %v934 = vpack.c.bf16 %v908, %v906
        %v935 = vpack.c.bf16 %v909, %v907
        %v936 = vpack.c.bf16 %v912, %v910
        %v937 = vpack.c.bf16 %v913, %v911
        %v938 = vpack.c.bf16 %v916, %v914
        %v939 = vpack.c.bf16 %v917, %v915
        %v940 = vpack.c.bf16 %v920, %v918
        %v941 = vpack.c.bf16 %v921, %v919
        %v942 = vpack.c.bf16 %v924, %v922
        %v943 = vpack.c.bf16 %v925, %v923
        %v944 = vpack.c.bf16 %v928, %v926
        %v945 = vpack.c.bf16 %v929, %v927
        %v946 = vld [vmem:[#allocation7] sm:$0xf]
        %v947 = vld [vmem:[#allocation7 + $0x4] sm:$0xf]
        %v948 = vld [vmem:[#allocation7 + $0x8] sm:$0xf]
        %v949 = vld [vmem:[#allocation7 + $0xc] sm:$0xf]
        %v950 = vld [vmem:[#allocation7 + $0x10] sm:$0xf]
        %v951 = vld [vmem:[#allocation7 + $0x14] sm:$0xf]
        %v952 = vld [vmem:[#allocation7 + $0x18] sm:$0xf]
        %v953 = vld [vmem:[#allocation7 + $0x1c] sm:$0xf]
        %v954 = vld [vmem:[#allocation7 + $0x20] sm:$0xf]
        %v955 = vld [vmem:[#allocation7 + $0x24] sm:$0xf]
        %v956 = vld [vmem:[#allocation7 + $0x28] sm:$0xf]
        %v957 = vld [vmem:[#allocation7 + $0x2c] sm:$0xf]
        %v958 = vld [vmem:[#allocation7 + $0x30] sm:$0xf]
        %v959 = vld [vmem:[#allocation7 + $0x34] sm:$0xf]
        %v960 = vld [vmem:[#allocation7 + $0x38] sm:$0xf]
        %v961 = vld [vmem:[#allocation7 + $0x3c] sm:$0xf]
        %v962 = vld [vmem:[#allocation7 + $0x40] sm:$0xf]
        %v963 = vld [vmem:[#allocation7 + $0x44] sm:$0xf]
        %v964 = vld [vmem:[#allocation7 + $0x48] sm:$0xf]
        %v965 = vld [vmem:[#allocation7 + $0x4c] sm:$0xf]
        %v966 = vld [vmem:[#allocation7 + $0x50] sm:$0xf]
        %v967 = vld [vmem:[#allocation7 + $0x54] sm:$0xf]
        %v968 = vld [vmem:[#allocation7 + $0x58] sm:$0xf]
        %v969 = vld [vmem:[#allocation7 + $0x5c] sm:$0xf]
        %v970 = vld [vmem:[#allocation7 + $0x60] sm:$0xf]
        %v971 = vld [vmem:[#allocation7 + $0x64] sm:$0xf]
        %v972 = vld [vmem:[#allocation7 + $0x68] sm:$0xf]
        %v973 = vld [vmem:[#allocation7 + $0x6c] sm:$0xf]
        %v974 = vld [vmem:[#allocation7 + $0x70] sm:$0xf]
        %v975 = vld [vmem:[#allocation7 + $0x74] sm:$0xf]
        %v976 = vld [vmem:[#allocation7 + $0x78] sm:$0xf]
        %v977 = vld [vmem:[#allocation7 + $0x7c] sm:$0xf]
        %v978 = vld [vmem:[%s4] sm:$0x1]
        %v980 = vlaneseq
        %v981 = vshrl.u32 %v980, 7
        %v982 = vsub.s32 0, %v981
        %v983 = vrot.slane %v978, %v982
        %v1017 = vunpack.c.l.b16 %v946
        %v1018 = vunpack.c.l.b16 %v947
        %v1019 = vunpack.c.l.b16 %v948
        %v1020 = vunpack.c.l.b16 %v949
        %v1021 = vunpack.c.l.b16 %v950
        %v1022 = vunpack.c.l.b16 %v951
        %v1023 = vunpack.c.l.b16 %v952
        %v1024 = vunpack.c.l.b16 %v953
        %v1025 = vunpack.c.l.b16 %v954
        %v1026 = vunpack.c.l.b16 %v955
        %v1027 = vunpack.c.l.b16 %v956
        %v1028 = vunpack.c.l.b16 %v957
        %v1029 = vunpack.c.l.b16 %v958
        %v1030 = vunpack.c.l.b16 %v959
        %v1031 = vunpack.c.l.b16 %v960
        %v1032 = vunpack.c.l.b16 %v961
        %v1033 = vunpack.c.l.b16 %v962
        %v1034 = vunpack.c.l.b16 %v963
        %v1035 = vunpack.c.l.b16 %v964
        %v1036 = vunpack.c.l.b16 %v965
        %v1037 = vunpack.c.l.b16 %v966
        %v1038 = vunpack.c.l.b16 %v967
        %v1039 = vunpack.c.l.b16 %v968
        %v1040 = vunpack.c.l.b16 %v969
        %v1041 = vunpack.c.l.b16 %v970
        %v1042 = vunpack.c.l.b16 %v971
        %v1043 = vunpack.c.l.b16 %v972
        %v1044 = vunpack.c.l.b16 %v973
        %v1045 = vunpack.c.l.b16 %v974
        %v1046 = vunpack.c.l.b16 %v975
        %v1047 = vunpack.c.l.b16 %v976
        %v1048 = vunpack.c.l.b16 %v977
        %v1049 = vpack.c.b16 %v1018, %v1017
        %v1050 = vpack.c.b16 %v1020, %v1019
        %v1051 = vpack.c.b16 %v1022, %v1021
        %v1052 = vpack.c.b16 %v1024, %v1023
        %v1053 = vpack.c.b16 %v1026, %v1025
        %v1054 = vpack.c.b16 %v1028, %v1027
        %v1055 = vpack.c.b16 %v1030, %v1029
        %v1056 = vpack.c.b16 %v1032, %v1031
        %v1057 = vpack.c.b16 %v1034, %v1033
        %v1058 = vpack.c.b16 %v1036, %v1035
        %v1059 = vpack.c.b16 %v1038, %v1037
        %v1060 = vpack.c.b16 %v1040, %v1039
        %v1061 = vpack.c.b16 %v1042, %v1041
        %v1062 = vpack.c.b16 %v1044, %v1043
        %v1063 = vpack.c.b16 %v1046, %v1045
        %v1064 = vpack.c.b16 %v1048, %v1047
        %1081 = vmatprep.subr.bf16.mxu0 0
        %1082 = vmatpush1.bf16.msra.mxu0 %v1049
        %1083 = vmatprep.subr.bf16.mxu0 0
        %1084 = vmatpush1.bf16.msra.mxu0 %v1050
        %1085 = vmatprep.subr.bf16.mxu0 0
        %1086 = vmatpush1.bf16.msra.mxu0 %v1051
        %1087 = vmatprep.subr.bf16.mxu0 0
        %1088 = vmatpush1.bf16.msra.mxu0 %v1052
        %1089 = vmatprep.subr.bf16.mxu0 0
        %1090 = vmatpush1.bf16.msra.mxu0 %v1053
        %1091 = vmatprep.subr.bf16.mxu0 0
        %1092 = vmatpush1.bf16.msra.mxu0 %v1054
        %1093 = vmatprep.subr.bf16.mxu0 0
        %1094 = vmatpush1.bf16.msra.mxu0 %v1055
        %1095 = vmatprep.subr.bf16.mxu0 0
        %1096 = vmatpush1.bf16.msra.mxu0 %v1056
        %1097 = vmatprep.subr.bf16.mxu0 0
        %1098 = vmatpush1.bf16.msra.mxu0 %v1057
        %1099 = vmatprep.subr.bf16.mxu0 0
        %1100 = vmatpush1.bf16.msra.mxu0 %v1058
        %1101 = vmatprep.subr.bf16.mxu0 0
        %1102 = vmatpush1.bf16.msra.mxu0 %v1059
        %1103 = vmatprep.subr.bf16.mxu0 0
        %1104 = vmatpush1.bf16.msra.mxu0 %v1060
        %1105 = vmatprep.subr.bf16.mxu0 0
        %1106 = vmatpush1.bf16.msra.mxu0 %v1061
        %1107 = vmatprep.subr.bf16.mxu0 0
        %1108 = vmatpush1.bf16.msra.mxu0 %v1062
        %1109 = vmatprep.subr.bf16.mxu0 0
        %1110 = vmatpush1.bf16.msra.mxu0 %v1063
        %1111 = vmatprep.subr.bf16.mxu0 0
        %1112 = vmatpush1.bf16.msra.mxu0 %v1064
        %1113 = vmatprep.mubr.bf16.mxu0 %v931
        %1114 = vmatmul.mubr.bf16.gmra.mrb[0].mxu0 %v930
        %v1115 = vpop.f32.mrb[0].mxu0
        %v1116 = vadd.f32 %v983, %v1115
        %v1117 = vpop.f32.mrb[0].mxu0
        %v1118 = vpop.f32.mrb[0].mxu0
        %v1119 = vadd.f32 %v983, %v1118
        %v1120 = vpop.f32.mrb[0].mxu0
        %1121 = vmatprep.mubr.bf16.mxu0 %v933
        %1122 = vmatmul.mubr.bf16.gmra.mrb[0].mxu0 %v932
        %v1123 = vpop.f32.mrb[0].mxu0
        %v1124 = vadd.f32 %v983, %v1123
        %v1125 = vpop.f32.mrb[0].mxu0
        %v1126 = vpop.f32.mrb[0].mxu0
        %v1127 = vadd.f32 %v983, %v1126
        %v1128 = vpop.f32.mrb[0].mxu0
        %1129 = vmatprep.mubr.bf16.mxu0 %v935
        %1130 = vmatmul.mubr.bf16.gmra.mrb[0].mxu0 %v934
        %v1131 = vpop.f32.mrb[0].mxu0
        %v1132 = vadd.f32 %v983, %v1131
        %v1133 = vpop.f32.mrb[0].mxu0
        %v1134 = vpop.f32.mrb[0].mxu0
        %v1135 = vadd.f32 %v983, %v1134
        %v1136 = vpop.f32.mrb[0].mxu0
        %1137 = vmatprep.mubr.bf16.mxu0 %v937
        %1138 = vmatmul.mubr.bf16.gmra.mrb[0].mxu0 %v936
        %v1139 = vpop.f32.mrb[0].mxu0
        %v1140 = vadd.f32 %v983, %v1139
        %v1141 = vpop.f32.mrb[0].mxu0
        %v1142 = vpop.f32.mrb[0].mxu0
        %v1143 = vadd.f32 %v983, %v1142
        %v1144 = vpop.f32.mrb[0].mxu0
        %1145 = vmatprep.mubr.bf16.mxu0 %v939
        %1146 = vmatmul.mubr.bf16.gmra.mrb[0].mxu0 %v938
        %v1147 = vpop.f32.mrb[0].mxu0
        %v1148 = vadd.f32 %v983, %v1147
        %v1149 = vpop.f32.mrb[0].mxu0
        %v1150 = vpop.f32.mrb[0].mxu0
        %v1151 = vadd.f32 %v983, %v1150
        %v1152 = vpop.f32.mrb[0].mxu0
        %1153 = vmatprep.mubr.bf16.mxu0 %v941
        %1154 = vmatmul.mubr.bf16.gmra.mrb[0].mxu0 %v940
        %v1155 = vpop.f32.mrb[0].mxu0
        %v1156 = vadd.f32 %v983, %v1155
        %v1157 = vpop.f32.mrb[0].mxu0
        %v1158 = vpop.f32.mrb[0].mxu0
        %v1159 = vadd.f32 %v983, %v1158
        %v1160 = vpop.f32.mrb[0].mxu0
        %1161 = vmatprep.mubr.bf16.mxu0 %v943
        %1162 = vmatmul.mubr.bf16.gmra.mrb[0].mxu0 %v942
        %v1163 = vpop.f32.mrb[0].mxu0
        %v1164 = vadd.f32 %v983, %v1163
        %v1165 = vpop.f32.mrb[0].mxu0
        %v1166 = vpop.f32.mrb[0].mxu0
        %v1167 = vadd.f32 %v983, %v1166
        %v1168 = vpop.f32.mrb[0].mxu0
        %1169 = vmatprep.mubr.bf16.mxu0 %v945
        %1170 = vmatmul.mubr.bf16.gmra.mrb[0].mxu0 %v944
        %v1171 = vpop.f32.mrb[0].mxu0
        %v1172 = vadd.f32 %v983, %v1171
        %v1173 = vpop.f32.mrb[0].mxu0
        %v1174 = vpop.f32.mrb[0].mxu0
        %v1175 = vadd.f32 %v983, %v1174
        %v1176 = vpop.f32.mrb[0].mxu0
        %1177 = vdwg.mxu0
        %vm1178 = vcmp.gt.f32.partialorder %v1116, 0.0
        %vm1179 = vcmp.gt.f32.partialorder %v1119, 0.0
        %vm1180 = vcmp.gt.f32.partialorder %v1124, 0.0
        %vm1181 = vcmp.gt.f32.partialorder %v1127, 0.0
        %vm1182 = vcmp.gt.f32.partialorder %v1132, 0.0
        %vm1183 = vcmp.gt.f32.partialorder %v1135, 0.0
        %vm1184 = vcmp.gt.f32.partialorder %v1140, 0.0
        %vm1185 = vcmp.gt.f32.partialorder %v1143, 0.0
        %vm1186 = vcmp.gt.f32.partialorder %v1148, 0.0
        %vm1187 = vcmp.gt.f32.partialorder %v1151, 0.0
        %vm1188 = vcmp.gt.f32.partialorder %v1156, 0.0
        %vm1189 = vcmp.gt.f32.partialorder %v1159, 0.0
        %vm1190 = vcmp.gt.f32.partialorder %v1164, 0.0
        %vm1191 = vcmp.gt.f32.partialorder %v1167, 0.0
        %vm1192 = vcmp.gt.f32.partialorder %v1172, 0.0
        %vm1193 = vcmp.gt.f32.partialorder %v1175, 0.0
        %v1194 = vmul.f32 %v1116, 0.01
        %v1195 = vmul.f32 %v1119, 0.01
        %v1196 = vmul.f32 %v1124, 0.01
        %v1197 = vmul.f32 %v1127, 0.01
        %v1198 = vmul.f32 %v1132, 0.01
        %v1199 = vmul.f32 %v1135, 0.01
        %v1200 = vmul.f32 %v1140, 0.01
        %v1201 = vmul.f32 %v1143, 0.01
        %v1202 = vmul.f32 %v1148, 0.01
        %v1203 = vmul.f32 %v1151, 0.01
        %v1204 = vmul.f32 %v1156, 0.01
        %v1205 = vmul.f32 %v1159, 0.01
        %v1206 = vmul.f32 %v1164, 0.01
        %v1207 = vmul.f32 %v1167, 0.01
        %v1208 = vmul.f32 %v1172, 0.01
        %v1209 = vmul.f32 %v1175, 0.01
        %v1210 = vsel %vm1178, %v1116, %v1194
        %v1211 = vsel %vm1179, %v1119, %v1195
        %v1212 = vsel %vm1180, %v1124, %v1196
        %v1213 = vsel %vm1181, %v1127, %v1197
        %v1214 = vsel %vm1182, %v1132, %v1198
        %v1215 = vsel %vm1183, %v1135, %v1199
        %v1216 = vsel %vm1184, %v1140, %v1200
        %v1217 = vsel %vm1185, %v1143, %v1201
        %v1218 = vsel %vm1186, %v1148, %v1202
        %v1219 = vsel %vm1187, %v1151, %v1203
        %v1220 = vsel %vm1188, %v1156, %v1204
        %v1221 = vsel %vm1189, %v1159, %v1205
        %v1222 = vsel %vm1190, %v1164, %v1206
        %v1223 = vsel %vm1191, %v1167, %v1207
        %v1224 = vsel %vm1192, %v1172, %v1208
        %v1225 = vsel %vm1193, %v1175, %v1209
        %v1226 = vpack.c.bf16 %v1211, %v1210
        %v1227 = vpack.c.bf16 %v1213, %v1212
        %v1228 = vpack.c.bf16 %v1215, %v1214
        %v1229 = vpack.c.bf16 %v1217, %v1216
        %v1230 = vpack.c.bf16 %v1219, %v1218
        %v1231 = vpack.c.bf16 %v1221, %v1220
        %v1232 = vpack.c.bf16 %v1223, %v1222
        %v1233 = vpack.c.bf16 %v1225, %v1224
        %v1234 = vld [vmem:[#allocation8] sm:$0xf]
        %v1235 = vld [vmem:[#allocation8 + $0x4] sm:$0xf]
        %v1236 = vld [vmem:[#allocation8 + $0x8] sm:$0xf]
        %v1237 = vld [vmem:[#allocation8 + $0xc] sm:$0xf]
        %v1238 = vld [vmem:[#allocation8 + $0x10] sm:$0xf]
        %v1239 = vld [vmem:[#allocation8 + $0x14] sm:$0xf]
        %v1240 = vld [vmem:[#allocation8 + $0x18] sm:$0xf]
        %v1241 = vld [vmem:[#allocation8 + $0x1c] sm:$0xf]
        %v1242 = vld [vmem:[#allocation8 + $0x20] sm:$0xf]
        %v1243 = vld [vmem:[#allocation8 + $0x24] sm:$0xf]
        %v1244 = vld [vmem:[#allocation8 + $0x28] sm:$0xf]
        %v1245 = vld [vmem:[#allocation8 + $0x2c] sm:$0xf]
        %v1246 = vld [vmem:[#allocation8 + $0x30] sm:$0xf]
        %v1247 = vld [vmem:[#allocation8 + $0x34] sm:$0xf]
        %v1248 = vld [vmem:[#allocation8 + $0x38] sm:$0xf]
        %v1249 = vld [vmem:[#allocation8 + $0x3c] sm:$0xf]
        %v1250 = vld [vmem:[%s6] sm:$0x1]
        %v1252 = vlaneseq
        %v1253 = vshrl.u32 %v1252, 7
        %v1254 = vsub.s32 0, %v1253
        %v1255 = vrot.slane %v1250, %v1254
        %v1273 = vunpack.c.l.b16 %v1234
        %v1274 = vunpack.c.l.b16 %v1235
        %v1275 = vunpack.c.l.b16 %v1236
        %v1276 = vunpack.c.l.b16 %v1237
        %v1277 = vunpack.c.l.b16 %v1238
        %v1278 = vunpack.c.l.b16 %v1239
        %v1279 = vunpack.c.l.b16 %v1240
        %v1280 = vunpack.c.l.b16 %v1241
        %v1281 = vunpack.c.l.b16 %v1242
        %v1282 = vunpack.c.l.b16 %v1243
        %v1283 = vunpack.c.l.b16 %v1244
        %v1284 = vunpack.c.l.b16 %v1245
        %v1285 = vunpack.c.l.b16 %v1246
        %v1286 = vunpack.c.l.b16 %v1247
        %v1287 = vunpack.c.l.b16 %v1248
        %v1288 = vunpack.c.l.b16 %v1249
        %v1289 = vpack.c.b16 %v1274, %v1273
        %v1290 = vpack.c.b16 %v1276, %v1275
        %v1291 = vpack.c.b16 %v1278, %v1277
        %v1292 = vpack.c.b16 %v1280, %v1279
        %v1293 = vpack.c.b16 %v1282, %v1281
        %v1294 = vpack.c.b16 %v1284, %v1283
        %v1295 = vpack.c.b16 %v1286, %v1285
        %v1296 = vpack.c.b16 %v1288, %v1287
        %1305 = vmatprep.subr.bf16.mxu0 0
        %1306 = vmatpush1.bf16.msra.mxu0 %v1289
        %1307 = vmatprep.subr.bf16.mxu0 0
        %1308 = vmatpush1.bf16.msra.mxu0 %v1290
        %1309 = vmatprep.subr.bf16.mxu0 0
        %1310 = vmatpush1.bf16.msra.mxu0 %v1291
        %1311 = vmatprep.subr.bf16.mxu0 0
        %1312 = vmatpush1.bf16.msra.mxu0 %v1292
        %1313 = vmatprep.subr.bf16.mxu0 0
        %1314 = vmatpush1.bf16.msra.mxu0 %v1293
        %1315 = vmatprep.subr.bf16.mxu0 0
        %1316 = vmatpush1.bf16.msra.mxu0 %v1294
        %1317 = vmatprep.subr.bf16.mxu0 0
        %1318 = vmatpush1.bf16.msra.mxu0 %v1295
        %1319 = vmatprep.subr.bf16.mxu0 0
        %1320 = vmatpush1.bf16.msra.mxu0 %v1296
        %1321 = vmatprep.subr.bf16.mxu0 0
        %1322 = vmatpush1.bf16.msra.mxu0 0
        %1323 = vmatprep.subr.bf16.mxu0 0
        %1324 = vmatpush1.bf16.msra.mxu0 0
        %1325 = vmatprep.subr.bf16.mxu0 0
        %1326 = vmatpush1.bf16.msra.mxu0 0
        %1327 = vmatprep.subr.bf16.mxu0 0
        %1328 = vmatpush1.bf16.msra.mxu0 0
        %1329 = vmatprep.subr.bf16.mxu0 0
        %1330 = vmatpush1.bf16.msra.mxu0 0
        %1331 = vmatprep.subr.bf16.mxu0 0
        %1332 = vmatpush1.bf16.msra.mxu0 0
        %1333 = vmatprep.subr.bf16.mxu0 0
        %1334 = vmatpush1.bf16.msra.mxu0 0
        %1335 = vmatprep.subr.bf16.mxu0 0
        %1336 = vmatpush1.bf16.msra.mxu0 0
        %1337 = vmatprep.mubr.bf16.mxu0 0
        %1338 = vmatmul.mubr.bf16.gmra.mrb[0].mxu0 %v1226
        %v1339 = vpop.f32.mrb[0].mxu0
        %v1340 = vadd.f32 %v1255, %v1339
        %v1341 = vpop.f32.mrb[0].mxu0
        %v1342 = vpop.f32.mrb[0].mxu0
        %v1343 = vadd.f32 %v1255, %v1342
        %v1344 = vpop.f32.mrb[0].mxu0
        %1345 = vmatprep.mubr.bf16.mxu0 0
        %1346 = vmatmul.mubr.bf16.gmra.mrb[0].mxu0 %v1227
        %v1347 = vpop.f32.mrb[0].mxu0
        %v1348 = vadd.f32 %v1255, %v1347
        %v1349 = vpop.f32.mrb[0].mxu0
        %v1350 = vpop.f32.mrb[0].mxu0
        %v1351 = vadd.f32 %v1255, %v1350
        %v1352 = vpop.f32.mrb[0].mxu0
        %1353 = vmatprep.mubr.bf16.mxu0 0
        %1354 = vmatmul.mubr.bf16.gmra.mrb[0].mxu0 %v1228
        %v1355 = vpop.f32.mrb[0].mxu0
        %v1356 = vadd.f32 %v1255, %v1355
        %v1357 = vpop.f32.mrb[0].mxu0
        %v1358 = vpop.f32.mrb[0].mxu0
        %v1359 = vadd.f32 %v1255, %v1358
        %v1360 = vpop.f32.mrb[0].mxu0
        %1361 = vmatprep.mubr.bf16.mxu0 0
        %1362 = vmatmul.mubr.bf16.gmra.mrb[0].mxu0 %v1229
        %v1363 = vpop.f32.mrb[0].mxu0
        %v1364 = vadd.f32 %v1255, %v1363
        %v1365 = vpop.f32.mrb[0].mxu0
        %v1366 = vpop.f32.mrb[0].mxu0
        %v1367 = vadd.f32 %v1255, %v1366
        %v1368 = vpop.f32.mrb[0].mxu0
        %1369 = vmatprep.mubr.bf16.mxu0 0
        %1370 = vmatmul.mubr.bf16.gmra.mrb[0].mxu0 %v1230
        %v1371 = vpop.f32.mrb[0].mxu0
        %v1372 = vadd.f32 %v1255, %v1371
        %v1373 = vpop.f32.mrb[0].mxu0
        %v1374 = vpop.f32.mrb[0].mxu0
        %v1375 = vadd.f32 %v1255, %v1374
        %v1376 = vpop.f32.mrb[0].mxu0
        %1377 = vmatprep.mubr.bf16.mxu0 0
        %1378 = vmatmul.mubr.bf16.gmra.mrb[0].mxu0 %v1231
        %v1379 = vpop.f32.mrb[0].mxu0
        %v1380 = vadd.f32 %v1255, %v1379
        %v1381 = vpop.f32.mrb[0].mxu0
        %v1382 = vpop.f32.mrb[0].mxu0
        %v1383 = vadd.f32 %v1255, %v1382
        %v1384 = vpop.f32.mrb[0].mxu0
        %1385 = vmatprep.mubr.bf16.mxu0 0
        %1386 = vmatmul.mubr.bf16.gmra.mrb[0].mxu0 %v1232
        %v1387 = vpop.f32.mrb[0].mxu0
        %v1388 = vadd.f32 %v1255, %v1387
        %v1389 = vpop.f32.mrb[0].mxu0
        %v1390 = vpop.f32.mrb[0].mxu0
        %v1391 = vadd.f32 %v1255, %v1390
        %v1392 = vpop.f32.mrb[0].mxu0
        %1393 = vmatprep.mubr.bf16.mxu0 0
        %1394 = vmatmul.mubr.bf16.gmra.mrb[0].mxu0 %v1233
        %v1395 = vpop.f32.mrb[0].mxu0
        %v1396 = vadd.f32 %v1255, %v1395
        %v1397 = vpop.f32.mrb[0].mxu0
        %v1398 = vpop.f32.mrb[0].mxu0
        %v1399 = vadd.f32 %v1255, %v1398
        %v1400 = vpop.f32.mrb[0].mxu0
        %1401 = vdwg.mxu0
        %vm1402 = vcmp.gt.f32.partialorder %v1340, 0.0
        %vm1403 = vcmp.gt.f32.partialorder %v1343, 0.0
        %vm1404 = vcmp.gt.f32.partialorder %v1348, 0.0
        %vm1405 = vcmp.gt.f32.partialorder %v1351, 0.0
        %vm1406 = vcmp.gt.f32.partialorder %v1356, 0.0
        %vm1407 = vcmp.gt.f32.partialorder %v1359, 0.0
        %vm1408 = vcmp.gt.f32.partialorder %v1364, 0.0
        %vm1409 = vcmp.gt.f32.partialorder %v1367, 0.0
        %vm1410 = vcmp.gt.f32.partialorder %v1372, 0.0
        %vm1411 = vcmp.gt.f32.partialorder %v1375, 0.0
        %vm1412 = vcmp.gt.f32.partialorder %v1380, 0.0
        %vm1413 = vcmp.gt.f32.partialorder %v1383, 0.0
        %vm1414 = vcmp.gt.f32.partialorder %v1388, 0.0
        %vm1415 = vcmp.gt.f32.partialorder %v1391, 0.0
        %vm1416 = vcmp.gt.f32.partialorder %v1396, 0.0
        %vm1417 = vcmp.gt.f32.partialorder %v1399, 0.0
        %v1418 = vmul.f32 %v1340, 0.01
        %v1419 = vmul.f32 %v1343, 0.01
        %v1420 = vmul.f32 %v1348, 0.01
        %v1421 = vmul.f32 %v1351, 0.01
        %v1422 = vmul.f32 %v1356, 0.01
        %v1423 = vmul.f32 %v1359, 0.01
        %v1424 = vmul.f32 %v1364, 0.01
        %v1425 = vmul.f32 %v1367, 0.01
        %v1426 = vmul.f32 %v1372, 0.01
        %v1427 = vmul.f32 %v1375, 0.01
        %v1428 = vmul.f32 %v1380, 0.01
        %v1429 = vmul.f32 %v1383, 0.01
        %v1430 = vmul.f32 %v1388, 0.01
        %v1431 = vmul.f32 %v1391, 0.01
        %v1432 = vmul.f32 %v1396, 0.01
        %v1433 = vmul.f32 %v1399, 0.01
        %v1434 = vsel %vm1402, %v1340, %v1418
        %v1435 = vsel %vm1403, %v1343, %v1419
        %v1436 = vsel %vm1404, %v1348, %v1420
        %v1437 = vsel %vm1405, %v1351, %v1421
        %v1438 = vsel %vm1406, %v1356, %v1422
        %v1439 = vsel %vm1407, %v1359, %v1423
        %v1440 = vsel %vm1408, %v1364, %v1424
        %v1441 = vsel %vm1409, %v1367, %v1425
        %v1442 = vsel %vm1410, %v1372, %v1426
        %v1443 = vsel %vm1411, %v1375, %v1427
        %v1444 = vsel %vm1412, %v1380, %v1428
        %v1445 = vsel %vm1413, %v1383, %v1429
        %v1446 = vsel %vm1414, %v1388, %v1430
        %v1447 = vsel %vm1415, %v1391, %v1431
        %v1448 = vsel %vm1416, %v1396, %v1432
        %v1449 = vsel %vm1417, %v1399, %v1433
        %v1450 = vpack.c.bf16 %v1435, %v1434
        %v1451 = vpack.c.bf16 %v1437, %v1436
        %v1452 = vpack.c.bf16 %v1439, %v1438
        %v1453 = vpack.c.bf16 %v1441, %v1440
        %v1454 = vpack.c.bf16 %v1443, %v1442
        %v1455 = vpack.c.bf16 %v1445, %v1444
        %v1456 = vpack.c.bf16 %v1447, %v1446
        %v1457 = vpack.c.bf16 %v1449, %v1448
        %s1458 = scalar_lea.vmem [#allocation8], 64
        %v1459 = vld [vmem:[%s1458] sm:$0xf]
        %v1460 = vld [vmem:[%s1458 + $0x4] sm:$0xf]
        %v1461 = vld [vmem:[%s1458 + $0x8] sm:$0xf]
        %v1462 = vld [vmem:[%s1458 + $0xc] sm:$0xf]
        %v1463 = vld [vmem:[%s1458 + $0x10] sm:$0xf]
        %v1464 = vld [vmem:[%s1458 + $0x14] sm:$0xf]
        %v1465 = vld [vmem:[%s1458 + $0x18] sm:$0xf]
        %v1466 = vld [vmem:[%s1458 + $0x1c] sm:$0xf]
        %v1467 = vld [vmem:[%s1458 + $0x20] sm:$0xf]
        %v1468 = vld [vmem:[%s1458 + $0x24] sm:$0xf]
        %v1469 = vld [vmem:[%s1458 + $0x28] sm:$0xf]
        %v1470 = vld [vmem:[%s1458 + $0x2c] sm:$0xf]
        %v1471 = vld [vmem:[%s1458 + $0x30] sm:$0xf]
        %v1472 = vld [vmem:[%s1458 + $0x34] sm:$0xf]
        %v1473 = vld [vmem:[%s1458 + $0x38] sm:$0xf]
        %v1474 = vld [vmem:[%s1458 + $0x3c] sm:$0xf]
        %s1475 = scalar_lea.vmem %s6, 1
        %v1476 = vld [vmem:[%s1475] sm:$0x1]
        %v1478 = vlaneseq
        %v1479 = vshrl.u32 %v1478, 7
        %v1480 = vsub.s32 0, %v1479
        %v1481 = vrot.slane %v1476, %v1480
        %v1499 = vunpack.c.l.b16 %v1459
        %v1500 = vunpack.c.l.b16 %v1460
        %v1501 = vunpack.c.l.b16 %v1461
        %v1502 = vunpack.c.l.b16 %v1462
        %v1503 = vunpack.c.l.b16 %v1463
        %v1504 = vunpack.c.l.b16 %v1464
        %v1505 = vunpack.c.l.b16 %v1465
        %v1506 = vunpack.c.l.b16 %v1466
        %v1507 = vunpack.c.l.b16 %v1467
        %v1508 = vunpack.c.l.b16 %v1468
        %v1509 = vunpack.c.l.b16 %v1469
        %v1510 = vunpack.c.l.b16 %v1470
        %v1511 = vunpack.c.l.b16 %v1471
        %v1512 = vunpack.c.l.b16 %v1472
        %v1513 = vunpack.c.l.b16 %v1473
        %v1514 = vunpack.c.l.b16 %v1474
        %v1515 = vpack.c.b16 %v1500, %v1499
        %v1516 = vpack.c.b16 %v1502, %v1501
        %v1517 = vpack.c.b16 %v1504, %v1503
        %v1518 = vpack.c.b16 %v1506, %v1505
        %v1519 = vpack.c.b16 %v1508, %v1507
        %v1520 = vpack.c.b16 %v1510, %v1509
        %v1521 = vpack.c.b16 %v1512, %v1511
        %v1522 = vpack.c.b16 %v1514, %v1513
        %1531 = vmatprep.subr.bf16.mxu0 0
        %1532 = vmatpush1.bf16.msra.mxu0 %v1515
        %1533 = vmatprep.subr.bf16.mxu0 0
        %1534 = vmatpush1.bf16.msra.mxu0 %v1516
        %1535 = vmatprep.subr.bf16.mxu0 0
        %1536 = vmatpush1.bf16.msra.mxu0 %v1517
        %1537 = vmatprep.subr.bf16.mxu0 0
        %1538 = vmatpush1.bf16.msra.mxu0 %v1518
        %1539 = vmatprep.subr.bf16.mxu0 0
        %1540 = vmatpush1.bf16.msra.mxu0 %v1519
        %1541 = vmatprep.subr.bf16.mxu0 0
        %1542 = vmatpush1.bf16.msra.mxu0 %v1520
        %1543 = vmatprep.subr.bf16.mxu0 0
        %1544 = vmatpush1.bf16.msra.mxu0 %v1521
        %1545 = vmatprep.subr.bf16.mxu0 0
        %1546 = vmatpush1.bf16.msra.mxu0 %v1522
        %1547 = vmatprep.subr.bf16.mxu0 0
        %1548 = vmatpush1.bf16.msra.mxu0 0
        %1549 = vmatprep.subr.bf16.mxu0 0
        %1550 = vmatpush1.bf16.msra.mxu0 0
        %1551 = vmatprep.subr.bf16.mxu0 0
        %1552 = vmatpush1.bf16.msra.mxu0 0
        %1553 = vmatprep.subr.bf16.mxu0 0
        %1554 = vmatpush1.bf16.msra.mxu0 0
        %1555 = vmatprep.subr.bf16.mxu0 0
        %1556 = vmatpush1.bf16.msra.mxu0 0
        %1557 = vmatprep.subr.bf16.mxu0 0
        %1558 = vmatpush1.bf16.msra.mxu0 0
        %1559 = vmatprep.subr.bf16.mxu0 0
        %1560 = vmatpush1.bf16.msra.mxu0 0
        %1561 = vmatprep.subr.bf16.mxu0 0
        %1562 = vmatpush1.bf16.msra.mxu0 0
        %1563 = vmatprep.mubr.bf16.mxu0 0
        %1564 = vmatmul.mubr.bf16.gmra.mrb[0].mxu0 %v1450
        %v1565 = vpop.f32.mrb[0].mxu0
        %v1566 = vadd.f32 %v1481, %v1565
        %v1567 = vpop.f32.mrb[0].mxu0
        %v1568 = vpop.f32.mrb[0].mxu0
        %v1569 = vadd.f32 %v1481, %v1568
        %v1570 = vpop.f32.mrb[0].mxu0
        %1571 = vmatprep.mubr.bf16.mxu0 0
        %1572 = vmatmul.mubr.bf16.gmra.mrb[0].mxu0 %v1451
        %v1573 = vpop.f32.mrb[0].mxu0
        %v1574 = vadd.f32 %v1481, %v1573
        %v1575 = vpop.f32.mrb[0].mxu0
        %v1576 = vpop.f32.mrb[0].mxu0
        %v1577 = vadd.f32 %v1481, %v1576
        %v1578 = vpop.f32.mrb[0].mxu0
        %1579 = vmatprep.mubr.bf16.mxu0 0
        %1580 = vmatmul.mubr.bf16.gmra.mrb[0].mxu0 %v1452
        %v1581 = vpop.f32.mrb[0].mxu0
        %v1582 = vadd.f32 %v1481, %v1581
        %v1583 = vpop.f32.mrb[0].mxu0
        %v1584 = vpop.f32.mrb[0].mxu0
        %v1585 = vadd.f32 %v1481, %v1584
        %v1586 = vpop.f32.mrb[0].mxu0
        %1587 = vmatprep.mubr.bf16.mxu0 0
        %1588 = vmatmul.mubr.bf16.gmra.mrb[0].mxu0 %v1453
        %v1589 = vpop.f32.mrb[0].mxu0
        %v1590 = vadd.f32 %v1481, %v1589
        %v1591 = vpop.f32.mrb[0].mxu0
        %v1592 = vpop.f32.mrb[0].mxu0
        %v1593 = vadd.f32 %v1481, %v1592
        %v1594 = vpop.f32.mrb[0].mxu0
        %1595 = vmatprep.mubr.bf16.mxu0 0
        %1596 = vmatmul.mubr.bf16.gmra.mrb[0].mxu0 %v1454
        %v1597 = vpop.f32.mrb[0].mxu0
        %v1598 = vadd.f32 %v1481, %v1597
        %v1599 = vpop.f32.mrb[0].mxu0
        %v1600 = vpop.f32.mrb[0].mxu0
        %v1601 = vadd.f32 %v1481, %v1600
        %v1602 = vpop.f32.mrb[0].mxu0
        %1603 = vmatprep.mubr.bf16.mxu0 0
        %1604 = vmatmul.mubr.bf16.gmra.mrb[0].mxu0 %v1455
        %v1605 = vpop.f32.mrb[0].mxu0
        %v1606 = vadd.f32 %v1481, %v1605
        %v1607 = vpop.f32.mrb[0].mxu0
        %v1608 = vpop.f32.mrb[0].mxu0
        %v1609 = vadd.f32 %v1481, %v1608
        %v1610 = vpop.f32.mrb[0].mxu0
        %1611 = vmatprep.mubr.bf16.mxu0 0
        %1612 = vmatmul.mubr.bf16.gmra.mrb[0].mxu0 %v1456
        %v1613 = vpop.f32.mrb[0].mxu0
        %v1614 = vadd.f32 %v1481, %v1613
        %v1615 = vpop.f32.mrb[0].mxu0
        %v1616 = vpop.f32.mrb[0].mxu0
        %v1617 = vadd.f32 %v1481, %v1616
        %v1618 = vpop.f32.mrb[0].mxu0
        %1619 = vmatprep.mubr.bf16.mxu0 0
        %1620 = vmatmul.mubr.bf16.gmra.mrb[0].mxu0 %v1457
        %v1621 = vpop.f32.mrb[0].mxu0
        %v1622 = vadd.f32 %v1481, %v1621
        %v1623 = vpop.f32.mrb[0].mxu0
        %v1624 = vpop.f32.mrb[0].mxu0
        %v1625 = vadd.f32 %v1481, %v1624
        %v1626 = vpop.f32.mrb[0].mxu0
        %1627 = vdwg.mxu0
        %vm1628 = vcmp.gt.f32.partialorder %v1566, 0.0
        %vm1629 = vcmp.gt.f32.partialorder %v1569, 0.0
        %vm1630 = vcmp.gt.f32.partialorder %v1574, 0.0
        %vm1631 = vcmp.gt.f32.partialorder %v1577, 0.0
        %vm1632 = vcmp.gt.f32.partialorder %v1582, 0.0
        %vm1633 = vcmp.gt.f32.partialorder %v1585, 0.0
        %vm1634 = vcmp.gt.f32.partialorder %v1590, 0.0
        %vm1635 = vcmp.gt.f32.partialorder %v1593, 0.0
        %vm1636 = vcmp.gt.f32.partialorder %v1598, 0.0
        %vm1637 = vcmp.gt.f32.partialorder %v1601, 0.0
        %vm1638 = vcmp.gt.f32.partialorder %v1606, 0.0
        %vm1639 = vcmp.gt.f32.partialorder %v1609, 0.0
        %vm1640 = vcmp.gt.f32.partialorder %v1614, 0.0
        %vm1641 = vcmp.gt.f32.partialorder %v1617, 0.0
        %vm1642 = vcmp.gt.f32.partialorder %v1622, 0.0
        %vm1643 = vcmp.gt.f32.partialorder %v1625, 0.0
        %v1644 = vmul.f32 %v1566, 0.01
        %v1645 = vmul.f32 %v1569, 0.01
        %v1646 = vmul.f32 %v1574, 0.01
        %v1647 = vmul.f32 %v1577, 0.01
        %v1648 = vmul.f32 %v1582, 0.01
        %v1649 = vmul.f32 %v1585, 0.01
        %v1650 = vmul.f32 %v1590, 0.01
        %v1651 = vmul.f32 %v1593, 0.01
        %v1652 = vmul.f32 %v1598, 0.01
        %v1653 = vmul.f32 %v1601, 0.01
        %v1654 = vmul.f32 %v1606, 0.01
        %v1655 = vmul.f32 %v1609, 0.01
        %v1656 = vmul.f32 %v1614, 0.01
        %v1657 = vmul.f32 %v1617, 0.01
        %v1658 = vmul.f32 %v1622, 0.01
        %v1659 = vmul.f32 %v1625, 0.01
        %v1660 = vsel %vm1628, %v1566, %v1644
        %v1661 = vsel %vm1629, %v1569, %v1645
        %v1662 = vsel %vm1630, %v1574, %v1646
        %v1663 = vsel %vm1631, %v1577, %v1647
        %v1664 = vsel %vm1632, %v1582, %v1648
        %v1665 = vsel %vm1633, %v1585, %v1649
        %v1666 = vsel %vm1634, %v1590, %v1650
        %v1667 = vsel %vm1635, %v1593, %v1651
        %v1668 = vsel %vm1636, %v1598, %v1652
        %v1669 = vsel %vm1637, %v1601, %v1653
        %v1670 = vsel %vm1638, %v1606, %v1654
        %v1671 = vsel %vm1639, %v1609, %v1655
        %v1672 = vsel %vm1640, %v1614, %v1656
        %v1673 = vsel %vm1641, %v1617, %v1657
        %v1674 = vsel %vm1642, %v1622, %v1658
        %v1675 = vsel %vm1643, %v1625, %v1659
        %v1676 = vpack.c.bf16 %v1661, %v1660
        %v1677 = vpack.c.bf16 %v1663, %v1662
        %v1678 = vpack.c.bf16 %v1665, %v1664
        %v1679 = vpack.c.bf16 %v1667, %v1666
        %v1680 = vpack.c.bf16 %v1669, %v1668
        %v1681 = vpack.c.bf16 %v1671, %v1670
        %v1682 = vpack.c.bf16 %v1673, %v1672
        %v1683 = vpack.c.bf16 %v1675, %v1674
        %v1684 = vld [vmem:[#allocation10] sm:$0xf]
        %v1685 = vld [vmem:[#allocation10 + $0x4] sm:$0xf]
        %v1686 = vld [vmem:[#allocation10 + $0x8] sm:$0xf]
        %v1687 = vld [vmem:[#allocation10 + $0xc] sm:$0xf]
        %v1688 = vld [vmem:[#allocation10 + $0x10] sm:$0xf]
        %v1689 = vld [vmem:[#allocation10 + $0x14] sm:$0xf]
        %v1690 = vld [vmem:[#allocation10 + $0x18] sm:$0xf]
        %v1691 = vld [vmem:[#allocation10 + $0x1c] sm:$0xf]
        %v1692 = vld [vmem:[#allocation10 + $0x20] sm:$0xf]
        %v1693 = vld [vmem:[#allocation10 + $0x24] sm:$0xf]
        %v1694 = vld [vmem:[#allocation10 + $0x28] sm:$0xf]
        %v1695 = vld [vmem:[#allocation10 + $0x2c] sm:$0xf]
        %v1696 = vld [vmem:[#allocation10 + $0x30] sm:$0xf]
        %v1697 = vld [vmem:[#allocation10 + $0x34] sm:$0xf]
        %v1698 = vld [vmem:[#allocation10 + $0x38] sm:$0xf]
        %v1699 = vld [vmem:[#allocation10 + $0x3c] sm:$0xf]
        %v1700 = vld [vmem:[%s8] sm:$0x1]
        %v1702 = vlaneseq
        %v1703 = vshrl.u32 %v1702, 7
        %v1704 = vsub.s32 0, %v1703
        %v1705 = vrot.slane %v1700, %v1704
        %v1723 = vunpack.c.l.b16 %v1684
        %v1724 = vunpack.c.l.b16 %v1685
        %v1725 = vunpack.c.l.b16 %v1686
        %v1726 = vunpack.c.l.b16 %v1687
        %v1727 = vunpack.c.l.b16 %v1688
        %v1728 = vunpack.c.l.b16 %v1689
        %v1729 = vunpack.c.l.b16 %v1690
        %v1730 = vunpack.c.l.b16 %v1691
        %v1731 = vunpack.c.l.b16 %v1692
        %v1732 = vunpack.c.l.b16 %v1693
        %v1733 = vunpack.c.l.b16 %v1694
        %v1734 = vunpack.c.l.b16 %v1695
        %v1735 = vunpack.c.l.b16 %v1696
        %v1736 = vunpack.c.l.b16 %v1697
        %v1737 = vunpack.c.l.b16 %v1698
        %v1738 = vunpack.c.l.b16 %v1699
        %v1739 = vpack.c.b16 %v1724, %v1723
        %v1740 = vpack.c.b16 %v1726, %v1725
        %v1741 = vpack.c.b16 %v1728, %v1727
        %v1742 = vpack.c.b16 %v1730, %v1729
        %v1743 = vpack.c.b16 %v1732, %v1731
        %v1744 = vpack.c.b16 %v1734, %v1733
        %v1745 = vpack.c.b16 %v1736, %v1735
        %v1746 = vpack.c.b16 %v1738, %v1737
        %1755 = vmatprep.subr.bf16.mxu0 0
        %1756 = vmatpush1.bf16.msra.mxu0 %v1739
        %1757 = vmatprep.subr.bf16.mxu0 0
        %1758 = vmatpush1.bf16.msra.mxu0 %v1740
        %1759 = vmatprep.subr.bf16.mxu0 0
        %1760 = vmatpush1.bf16.msra.mxu0 %v1741
        %1761 = vmatprep.subr.bf16.mxu0 0
        %1762 = vmatpush1.bf16.msra.mxu0 %v1742
        %1763 = vmatprep.subr.bf16.mxu0 0
        %1764 = vmatpush1.bf16.msra.mxu0 %v1743
        %1765 = vmatprep.subr.bf16.mxu0 0
        %1766 = vmatpush1.bf16.msra.mxu0 %v1744
        %1767 = vmatprep.subr.bf16.mxu0 0
        %1768 = vmatpush1.bf16.msra.mxu0 %v1745
        %1769 = vmatprep.subr.bf16.mxu0 0
        %1770 = vmatpush1.bf16.msra.mxu0 %v1746
        %1771 = vmatprep.subr.bf16.mxu0 0
        %1772 = vmatpush1.bf16.msra.mxu0 0
        %1773 = vmatprep.subr.bf16.mxu0 0
        %1774 = vmatpush1.bf16.msra.mxu0 0
        %1775 = vmatprep.subr.bf16.mxu0 0
        %1776 = vmatpush1.bf16.msra.mxu0 0
        %1777 = vmatprep.subr.bf16.mxu0 0
        %1778 = vmatpush1.bf16.msra.mxu0 0
        %1779 = vmatprep.subr.bf16.mxu0 0
        %1780 = vmatpush1.bf16.msra.mxu0 0
        %1781 = vmatprep.subr.bf16.mxu0 0
        %1782 = vmatpush1.bf16.msra.mxu0 0
        %1783 = vmatprep.subr.bf16.mxu0 0
        %1784 = vmatpush1.bf16.msra.mxu0 0
        %1785 = vmatprep.subr.bf16.mxu0 0
        %1786 = vmatpush1.bf16.msra.mxu0 0
        %1787 = vmatprep.mubr.bf16.mxu0 0
        %1788 = vmatmul.mubr.bf16.gmra.mrb[0].mxu0 %v1676
        %v1789 = vpop.f32.mrb[0].mxu0
        %v1790 = vadd.f32 %v1705, %v1789
        %v1791 = vpop.f32.mrb[0].mxu0
        %v1792 = vpop.f32.mrb[0].mxu0
        %v1793 = vadd.f32 %v1705, %v1792
        %v1794 = vpop.f32.mrb[0].mxu0
        %1795 = vmatprep.mubr.bf16.mxu0 0
        %1796 = vmatmul.mubr.bf16.gmra.mrb[0].mxu0 %v1677
        %v1797 = vpop.f32.mrb[0].mxu0
        %v1798 = vadd.f32 %v1705, %v1797
        %v1799 = vpop.f32.mrb[0].mxu0
        %v1800 = vpop.f32.mrb[0].mxu0
        %v1801 = vadd.f32 %v1705, %v1800
        %v1802 = vpop.f32.mrb[0].mxu0
        %1803 = vmatprep.mubr.bf16.mxu0 0
        %1804 = vmatmul.mubr.bf16.gmra.mrb[0].mxu0 %v1678
        %v1805 = vpop.f32.mrb[0].mxu0
        %v1806 = vadd.f32 %v1705, %v1805
        %v1807 = vpop.f32.mrb[0].mxu0
        %v1808 = vpop.f32.mrb[0].mxu0
        %v1809 = vadd.f32 %v1705, %v1808
        %v1810 = vpop.f32.mrb[0].mxu0
        %1811 = vmatprep.mubr.bf16.mxu0 0
        %1812 = vmatmul.mubr.bf16.gmra.mrb[0].mxu0 %v1679
        %v1813 = vpop.f32.mrb[0].mxu0
        %v1814 = vadd.f32 %v1705, %v1813
        %v1815 = vpop.f32.mrb[0].mxu0
        %v1816 = vpop.f32.mrb[0].mxu0
        %v1817 = vadd.f32 %v1705, %v1816
        %v1818 = vpop.f32.mrb[0].mxu0
        %1819 = vmatprep.mubr.bf16.mxu0 0
        %1820 = vmatmul.mubr.bf16.gmra.mrb[0].mxu0 %v1680
        %v1821 = vpop.f32.mrb[0].mxu0
        %v1822 = vadd.f32 %v1705, %v1821
        %v1823 = vpop.f32.mrb[0].mxu0
        %v1824 = vpop.f32.mrb[0].mxu0
        %v1825 = vadd.f32 %v1705, %v1824
        %v1826 = vpop.f32.mrb[0].mxu0
        %1827 = vmatprep.mubr.bf16.mxu0 0
        %1828 = vmatmul.mubr.bf16.gmra.mrb[0].mxu0 %v1681
        %v1829 = vpop.f32.mrb[0].mxu0
        %v1830 = vadd.f32 %v1705, %v1829
        %v1831 = vpop.f32.mrb[0].mxu0
        %v1832 = vpop.f32.mrb[0].mxu0
        %v1833 = vadd.f32 %v1705, %v1832
        %v1834 = vpop.f32.mrb[0].mxu0
        %1835 = vmatprep.mubr.bf16.mxu0 0
        %1836 = vmatmul.mubr.bf16.gmra.mrb[0].mxu0 %v1682
        %v1837 = vpop.f32.mrb[0].mxu0
        %v1838 = vadd.f32 %v1705, %v1837
        %v1839 = vpop.f32.mrb[0].mxu0
        %v1840 = vpop.f32.mrb[0].mxu0
        %v1841 = vadd.f32 %v1705, %v1840
        %v1842 = vpop.f32.mrb[0].mxu0
        %1843 = vmatprep.mubr.bf16.mxu0 0
        %1844 = vmatmul.mubr.bf16.gmra.mrb[0].mxu0 %v1683
        %v1845 = vpop.f32.mrb[0].mxu0
        %v1846 = vadd.f32 %v1705, %v1845
        %v1847 = vpop.f32.mrb[0].mxu0
        %v1848 = vpop.f32.mrb[0].mxu0
        %v1849 = vadd.f32 %v1705, %v1848
        %v1850 = vpop.f32.mrb[0].mxu0
        %1851 = vdwg.mxu0
        %vm1852 = vcmp.gt.f32.partialorder %v1790, 0.0
        %vm1853 = vcmp.gt.f32.partialorder %v1793, 0.0
        %vm1854 = vcmp.gt.f32.partialorder %v1798, 0.0
        %vm1855 = vcmp.gt.f32.partialorder %v1801, 0.0
        %vm1856 = vcmp.gt.f32.partialorder %v1806, 0.0
        %vm1857 = vcmp.gt.f32.partialorder %v1809, 0.0
        %vm1858 = vcmp.gt.f32.partialorder %v1814, 0.0
        %vm1859 = vcmp.gt.f32.partialorder %v1817, 0.0
        %vm1860 = vcmp.gt.f32.partialorder %v1822, 0.0
        %vm1861 = vcmp.gt.f32.partialorder %v1825, 0.0
        %vm1862 = vcmp.gt.f32.partialorder %v1830, 0.0
        %vm1863 = vcmp.gt.f32.partialorder %v1833, 0.0
        %vm1864 = vcmp.gt.f32.partialorder %v1838, 0.0
        %vm1865 = vcmp.gt.f32.partialorder %v1841, 0.0
        %vm1866 = vcmp.gt.f32.partialorder %v1846, 0.0
        %vm1867 = vcmp.gt.f32.partialorder %v1849, 0.0
        %v1868 = vmul.f32 %v1790, 0.01
        %v1869 = vmul.f32 %v1793, 0.01
        %v1870 = vmul.f32 %v1798, 0.01
        %v1871 = vmul.f32 %v1801, 0.01
        %v1872 = vmul.f32 %v1806, 0.01
        %v1873 = vmul.f32 %v1809, 0.01
        %v1874 = vmul.f32 %v1814, 0.01
        %v1875 = vmul.f32 %v1817, 0.01
        %v1876 = vmul.f32 %v1822, 0.01
        %v1877 = vmul.f32 %v1825, 0.01
        %v1878 = vmul.f32 %v1830, 0.01
        %v1879 = vmul.f32 %v1833, 0.01
        %v1880 = vmul.f32 %v1838, 0.01
        %v1881 = vmul.f32 %v1841, 0.01
        %v1882 = vmul.f32 %v1846, 0.01
        %v1883 = vmul.f32 %v1849, 0.01
        %v1884 = vsel %vm1852, %v1790, %v1868
        %v1885 = vsel %vm1853, %v1793, %v1869
        %v1886 = vsel %vm1854, %v1798, %v1870
        %v1887 = vsel %vm1855, %v1801, %v1871
        %v1888 = vsel %vm1856, %v1806, %v1872
        %v1889 = vsel %vm1857, %v1809, %v1873
        %v1890 = vsel %vm1858, %v1814, %v1874
        %v1891 = vsel %vm1859, %v1817, %v1875
        %v1892 = vsel %vm1860, %v1822, %v1876
        %v1893 = vsel %vm1861, %v1825, %v1877
        %v1894 = vsel %vm1862, %v1830, %v1878
        %v1895 = vsel %vm1863, %v1833, %v1879
        %v1896 = vsel %vm1864, %v1838, %v1880
        %v1897 = vsel %vm1865, %v1841, %v1881
        %v1898 = vsel %vm1866, %v1846, %v1882
        %v1899 = vsel %vm1867, %v1849, %v1883
        %v1900 = vpack.c.bf16 %v1885, %v1884
        %v1901 = vpack.c.bf16 %v1887, %v1886
        %v1902 = vpack.c.bf16 %v1889, %v1888
        %v1903 = vpack.c.bf16 %v1891, %v1890
        %v1904 = vpack.c.bf16 %v1893, %v1892
        %v1905 = vpack.c.bf16 %v1895, %v1894
        %v1906 = vpack.c.bf16 %v1897, %v1896
        %v1907 = vpack.c.bf16 %v1899, %v1898
        %v1908 = vld [vmem:[#allocation11] sm:$0xf]
        %v1909 = vld [vmem:[#allocation11 + $0x4] sm:$0xf]
        %v1910 = vld [vmem:[#allocation11 + $0x8] sm:$0xf]
        %v1911 = vld [vmem:[#allocation11 + $0xc] sm:$0xf]
        %v1912 = vld [vmem:[#allocation11 + $0x10] sm:$0xf]
        %v1913 = vld [vmem:[#allocation11 + $0x14] sm:$0xf]
        %v1914 = vld [vmem:[#allocation11 + $0x18] sm:$0xf]
        %v1915 = vld [vmem:[#allocation11 + $0x1c] sm:$0xf]
        %v1916 = vld [vmem:[#allocation11 + $0x20] sm:$0xf]
        %v1917 = vld [vmem:[#allocation11 + $0x24] sm:$0xf]
        %v1918 = vld [vmem:[#allocation11 + $0x28] sm:$0xf]
        %v1919 = vld [vmem:[#allocation11 + $0x2c] sm:$0xf]
        %v1920 = vld [vmem:[#allocation11 + $0x30] sm:$0xf]
        %v1921 = vld [vmem:[#allocation11 + $0x34] sm:$0xf]
        %v1922 = vld [vmem:[#allocation11 + $0x38] sm:$0xf]
        %v1923 = vld [vmem:[#allocation11 + $0x3c] sm:$0xf]
        %v1924 = vld [vmem:[%s10] sm:$0x1]
        %v1926 = vlaneseq
        %v1927 = vshrl.u32 %v1926, 7
        %v1928 = vsub.s32 0, %v1927
        %v1929 = vrot.slane %v1924, %v1928
        %v1947 = vunpack.c.l.b16 %v1908
        %v1948 = vunpack.c.l.b16 %v1909
        %v1949 = vunpack.c.l.b16 %v1910
        %v1950 = vunpack.c.l.b16 %v1911
        %v1951 = vunpack.c.l.b16 %v1912
        %v1952 = vunpack.c.l.b16 %v1913
        %v1953 = vunpack.c.l.b16 %v1914
        %v1954 = vunpack.c.l.b16 %v1915
        %v1955 = vunpack.c.l.b16 %v1916
        %v1956 = vunpack.c.l.b16 %v1917
        %v1957 = vunpack.c.l.b16 %v1918
        %v1958 = vunpack.c.l.b16 %v1919
        %v1959 = vunpack.c.l.b16 %v1920
        %v1960 = vunpack.c.l.b16 %v1921
        %v1961 = vunpack.c.l.b16 %v1922
        %v1962 = vunpack.c.l.b16 %v1923
        %v1963 = vpack.c.b16 %v1948, %v1947
        %v1964 = vpack.c.b16 %v1950, %v1949
        %v1965 = vpack.c.b16 %v1952, %v1951
        %v1966 = vpack.c.b16 %v1954, %v1953
        %v1967 = vpack.c.b16 %v1956, %v1955
        %v1968 = vpack.c.b16 %v1958, %v1957
        %v1969 = vpack.c.b16 %v1960, %v1959
        %v1970 = vpack.c.b16 %v1962, %v1961
        %1979 = vmatprep.subr.bf16.mxu0 0
        %1980 = vmatpush1.bf16.msra.mxu0 %v1963
        %1981 = vmatprep.subr.bf16.mxu0 0
        %1982 = vmatpush1.bf16.msra.mxu0 %v1964
        %1983 = vmatprep.subr.bf16.mxu0 0
        %1984 = vmatpush1.bf16.msra.mxu0 %v1965
        %1985 = vmatprep.subr.bf16.mxu0 0
        %1986 = vmatpush1.bf16.msra.mxu0 %v1966
        %1987 = vmatprep.subr.bf16.mxu0 0
        %1988 = vmatpush1.bf16.msra.mxu0 %v1967
        %1989 = vmatprep.subr.bf16.mxu0 0
        %1990 = vmatpush1.bf16.msra.mxu0 %v1968
        %1991 = vmatprep.subr.bf16.mxu0 0
        %1992 = vmatpush1.bf16.msra.mxu0 %v1969
        %1993 = vmatprep.subr.bf16.mxu0 0
        %1994 = vmatpush1.bf16.msra.mxu0 %v1970
        %1995 = vmatprep.subr.bf16.mxu0 0
        %1996 = vmatpush1.bf16.msra.mxu0 0
        %1997 = vmatprep.subr.bf16.mxu0 0
        %1998 = vmatpush1.bf16.msra.mxu0 0
        %1999 = vmatprep.subr.bf16.mxu0 0
        %2000 = vmatpush1.bf16.msra.mxu0 0
        %2001 = vmatprep.subr.bf16.mxu0 0
        %2002 = vmatpush1.bf16.msra.mxu0 0
        %2003 = vmatprep.subr.bf16.mxu0 0
        %2004 = vmatpush1.bf16.msra.mxu0 0
        %2005 = vmatprep.subr.bf16.mxu0 0
        %2006 = vmatpush1.bf16.msra.mxu0 0
        %2007 = vmatprep.subr.bf16.mxu0 0
        %2008 = vmatpush1.bf16.msra.mxu0 0
        %2009 = vmatprep.subr.bf16.mxu0 0
        %2010 = vmatpush1.bf16.msra.mxu0 0
        %2011 = vmatprep.mubr.bf16.mxu0 0
        %2012 = vmatmul.mubr.bf16.gmra.mrb[0].mxu0 %v1900
        %v2013 = vpop.f32.mrb[0].mxu0
        %v2014 = vadd.f32 %v1929, %v2013
        %v2015 = vpop.f32.mrb[0].mxu0
        %v2016 = vpop.f32.mrb[0].mxu0
        %v2017 = vadd.f32 %v1929, %v2016
        %v2018 = vpop.f32.mrb[0].mxu0
        %2019 = vmatprep.mubr.bf16.mxu0 0
        %2020 = vmatmul.mubr.bf16.gmra.mrb[0].mxu0 %v1901
        %v2021 = vpop.f32.mrb[0].mxu0
        %v2022 = vadd.f32 %v1929, %v2021
        %v2023 = vpop.f32.mrb[0].mxu0
        %v2024 = vpop.f32.mrb[0].mxu0
        %v2025 = vadd.f32 %v1929, %v2024
        %v2026 = vpop.f32.mrb[0].mxu0
        %2027 = vmatprep.mubr.bf16.mxu0 0
        %2028 = vmatmul.mubr.bf16.gmra.mrb[0].mxu0 %v1902
        %v2029 = vpop.f32.mrb[0].mxu0
        %v2030 = vadd.f32 %v1929, %v2029
        %v2031 = vpop.f32.mrb[0].mxu0
        %v2032 = vpop.f32.mrb[0].mxu0
        %v2033 = vadd.f32 %v1929, %v2032
        %v2034 = vpop.f32.mrb[0].mxu0
        %2035 = vmatprep.mubr.bf16.mxu0 0
        %2036 = vmatmul.mubr.bf16.gmra.mrb[0].mxu0 %v1903
        %v2037 = vpop.f32.mrb[0].mxu0
        %v2038 = vadd.f32 %v1929, %v2037
        %v2039 = vpop.f32.mrb[0].mxu0
        %v2040 = vpop.f32.mrb[0].mxu0
        %v2041 = vadd.f32 %v1929, %v2040
        %v2042 = vpop.f32.mrb[0].mxu0
        %2043 = vmatprep.mubr.bf16.mxu0 0
        %2044 = vmatmul.mubr.bf16.gmra.mrb[0].mxu0 %v1904
        %v2045 = vpop.f32.mrb[0].mxu0
        %v2046 = vadd.f32 %v1929, %v2045
        %v2047 = vpop.f32.mrb[0].mxu0
        %v2048 = vpop.f32.mrb[0].mxu0
        %v2049 = vadd.f32 %v1929, %v2048
        %v2050 = vpop.f32.mrb[0].mxu0
        %2051 = vmatprep.mubr.bf16.mxu0 0
        %2052 = vmatmul.mubr.bf16.gmra.mrb[0].mxu0 %v1905
        %v2053 = vpop.f32.mrb[0].mxu0
        %v2054 = vadd.f32 %v1929, %v2053
        %v2055 = vpop.f32.mrb[0].mxu0
        %v2056 = vpop.f32.mrb[0].mxu0
        %v2057 = vadd.f32 %v1929, %v2056
        %v2058 = vpop.f32.mrb[0].mxu0
        %2059 = vmatprep.mubr.bf16.mxu0 0
        %2060 = vmatmul.mubr.bf16.gmra.mrb[0].mxu0 %v1906
        %v2061 = vpop.f32.mrb[0].mxu0
        %v2062 = vadd.f32 %v1929, %v2061
        %v2063 = vpop.f32.mrb[0].mxu0
        %v2064 = vpop.f32.mrb[0].mxu0
        %v2065 = vadd.f32 %v1929, %v2064
        %v2066 = vpop.f32.mrb[0].mxu0
        %2067 = vmatprep.mubr.bf16.mxu0 0
        %2068 = vmatmul.mubr.bf16.gmra.mrb[0].mxu0 %v1907
        %v2069 = vpop.f32.mrb[0].mxu0
        %v2070 = vadd.f32 %v1929, %v2069
        %v2071 = vpop.f32.mrb[0].mxu0
        %v2072 = vpop.f32.mrb[0].mxu0
        %v2073 = vadd.f32 %v1929, %v2072
        %v2074 = vpop.f32.mrb[0].mxu0
        %2075 = vdwg.mxu0
        %vm2076 = vcmp.gt.f32.partialorder %v2014, 0.0
        %vm2077 = vcmp.gt.f32.partialorder %v2017, 0.0
        %vm2078 = vcmp.gt.f32.partialorder %v2022, 0.0
        %vm2079 = vcmp.gt.f32.partialorder %v2025, 0.0
        %vm2080 = vcmp.gt.f32.partialorder %v2030, 0.0
        %vm2081 = vcmp.gt.f32.partialorder %v2033, 0.0
        %vm2082 = vcmp.gt.f32.partialorder %v2038, 0.0
        %vm2083 = vcmp.gt.f32.partialorder %v2041, 0.0
        %vm2084 = vcmp.gt.f32.partialorder %v2046, 0.0
        %vm2085 = vcmp.gt.f32.partialorder %v2049, 0.0
        %vm2086 = vcmp.gt.f32.partialorder %v2054, 0.0
        %vm2087 = vcmp.gt.f32.partialorder %v2057, 0.0
        %vm2088 = vcmp.gt.f32.partialorder %v2062, 0.0
        %vm2089 = vcmp.gt.f32.partialorder %v2065, 0.0
        %vm2090 = vcmp.gt.f32.partialorder %v2070, 0.0
        %vm2091 = vcmp.gt.f32.partialorder %v2073, 0.0
        %v2092 = vmul.f32 %v2014, 0.01
        %v2093 = vmul.f32 %v2017, 0.01
        %v2094 = vmul.f32 %v2022, 0.01
        %v2095 = vmul.f32 %v2025, 0.01
        %v2096 = vmul.f32 %v2030, 0.01
        %v2097 = vmul.f32 %v2033, 0.01
        %v2098 = vmul.f32 %v2038, 0.01
        %v2099 = vmul.f32 %v2041, 0.01
        %v2100 = vmul.f32 %v2046, 0.01
        %v2101 = vmul.f32 %v2049, 0.01
        %v2102 = vmul.f32 %v2054, 0.01
        %v2103 = vmul.f32 %v2057, 0.01
        %v2104 = vmul.f32 %v2062, 0.01
        %v2105 = vmul.f32 %v2065, 0.01
        %v2106 = vmul.f32 %v2070, 0.01
        %v2107 = vmul.f32 %v2073, 0.01
        %v2108 = vsel %vm2076, %v2014, %v2092
        %v2109 = vsel %vm2077, %v2017, %v2093
        %v2110 = vsel %vm2078, %v2022, %v2094
        %v2111 = vsel %vm2079, %v2025, %v2095
        %v2112 = vsel %vm2080, %v2030, %v2096
        %v2113 = vsel %vm2081, %v2033, %v2097
        %v2114 = vsel %vm2082, %v2038, %v2098
        %v2115 = vsel %vm2083, %v2041, %v2099
        %v2116 = vsel %vm2084, %v2046, %v2100
        %v2117 = vsel %vm2085, %v2049, %v2101
        %v2118 = vsel %vm2086, %v2054, %v2102
        %v2119 = vsel %vm2087, %v2057, %v2103
        %v2120 = vsel %vm2088, %v2062, %v2104
        %v2121 = vsel %vm2089, %v2065, %v2105
        %v2122 = vsel %vm2090, %v2070, %v2106
        %v2123 = vsel %vm2091, %v2073, %v2107
        %v2124 = vpack.c.bf16 %v2109, %v2108
        %v2125 = vpack.c.bf16 %v2111, %v2110
        %v2126 = vpack.c.bf16 %v2113, %v2112
        %v2127 = vpack.c.bf16 %v2115, %v2114
        %v2128 = vpack.c.bf16 %v2117, %v2116
        %v2129 = vpack.c.bf16 %v2119, %v2118
        %v2130 = vpack.c.bf16 %v2121, %v2120
        %v2131 = vpack.c.bf16 %v2123, %v2122
        %v2132 = vld [vmem:[#allocation13] sm:$0xf]
        %v2133 = vld [vmem:[#allocation13 + $0x4] sm:$0xf]
        %v2134 = vld [vmem:[#allocation13 + $0x8] sm:$0xf]
        %v2135 = vld [vmem:[#allocation13 + $0xc] sm:$0xf]
        %v2136 = vld [vmem:[#allocation13 + $0x10] sm:$0xf]
        %v2137 = vld [vmem:[#allocation13 + $0x14] sm:$0xf]
        %v2138 = vld [vmem:[#allocation13 + $0x18] sm:$0xf]
        %v2139 = vld [vmem:[#allocation13 + $0x1c] sm:$0xf]
        %v2140 = vld [vmem:[#allocation13 + $0x20] sm:$0xf]
        %v2141 = vld [vmem:[#allocation13 + $0x24] sm:$0xf]
        %v2142 = vld [vmem:[#allocation13 + $0x28] sm:$0xf]
        %v2143 = vld [vmem:[#allocation13 + $0x2c] sm:$0xf]
        %v2144 = vld [vmem:[#allocation13 + $0x30] sm:$0xf]
        %v2145 = vld [vmem:[#allocation13 + $0x34] sm:$0xf]
        %v2146 = vld [vmem:[#allocation13 + $0x38] sm:$0xf]
        %v2147 = vld [vmem:[#allocation13 + $0x3c] sm:$0xf]
        %v2148 = vld [vmem:[%s12] sm:$0x1]
        %v2150 = vlaneseq
        %v2151 = vshrl.u32 %v2150, 7
        %v2152 = vsub.s32 0, %v2151
        %v2153 = vrot.slane %v2148, %v2152
        %v2171 = vunpack.c.l.b16 %v2132
        %v2172 = vunpack.c.l.b16 %v2133
        %v2173 = vunpack.c.l.b16 %v2134
        %v2174 = vunpack.c.l.b16 %v2135
        %v2175 = vunpack.c.l.b16 %v2136
        %v2176 = vunpack.c.l.b16 %v2137
        %v2177 = vunpack.c.l.b16 %v2138
        %v2178 = vunpack.c.l.b16 %v2139
        %v2179 = vunpack.c.l.b16 %v2140
        %v2180 = vunpack.c.l.b16 %v2141
        %v2181 = vunpack.c.l.b16 %v2142
        %v2182 = vunpack.c.l.b16 %v2143
        %v2183 = vunpack.c.l.b16 %v2144
        %v2184 = vunpack.c.l.b16 %v2145
        %v2185 = vunpack.c.l.b16 %v2146
        %v2186 = vunpack.c.l.b16 %v2147
        %v2187 = vpack.c.b16 %v2172, %v2171
        %v2188 = vpack.c.b16 %v2174, %v2173
        %v2189 = vpack.c.b16 %v2176, %v2175
        %v2190 = vpack.c.b16 %v2178, %v2177
        %v2191 = vpack.c.b16 %v2180, %v2179
        %v2192 = vpack.c.b16 %v2182, %v2181
        %v2193 = vpack.c.b16 %v2184, %v2183
        %v2194 = vpack.c.b16 %v2186, %v2185
        %2203 = vmatprep.subr.bf16.mxu0 0
        %2204 = vmatpush1.bf16.msra.mxu0 %v2187
        %2205 = vmatprep.subr.bf16.mxu0 0
        %2206 = vmatpush1.bf16.msra.mxu0 %v2188
        %2207 = vmatprep.subr.bf16.mxu0 0
        %2208 = vmatpush1.bf16.msra.mxu0 %v2189
        %2209 = vmatprep.subr.bf16.mxu0 0
        %2210 = vmatpush1.bf16.msra.mxu0 %v2190
        %2211 = vmatprep.subr.bf16.mxu0 0
        %2212 = vmatpush1.bf16.msra.mxu0 %v2191
        %2213 = vmatprep.subr.bf16.mxu0 0
        %2214 = vmatpush1.bf16.msra.mxu0 %v2192
        %2215 = vmatprep.subr.bf16.mxu0 0
        %2216 = vmatpush1.bf16.msra.mxu0 %v2193
        %2217 = vmatprep.subr.bf16.mxu0 0
        %2218 = vmatpush1.bf16.msra.mxu0 %v2194
        %2219 = vmatprep.subr.bf16.mxu0 0
        %2220 = vmatpush1.bf16.msra.mxu0 0
        %2221 = vmatprep.subr.bf16.mxu0 0
        %2222 = vmatpush1.bf16.msra.mxu0 0
        %2223 = vmatprep.subr.bf16.mxu0 0
        %2224 = vmatpush1.bf16.msra.mxu0 0
        %2225 = vmatprep.subr.bf16.mxu0 0
        %2226 = vmatpush1.bf16.msra.mxu0 0
        %2227 = vmatprep.subr.bf16.mxu0 0
        %2228 = vmatpush1.bf16.msra.mxu0 0
        %2229 = vmatprep.subr.bf16.mxu0 0
        %2230 = vmatpush1.bf16.msra.mxu0 0
        %2231 = vmatprep.subr.bf16.mxu0 0
        %2232 = vmatpush1.bf16.msra.mxu0 0
        %2233 = vmatprep.subr.bf16.mxu0 0
        %2234 = vmatpush1.bf16.msra.mxu0 0
        %2235 = vmatprep.mubr.bf16.mxu0 0
        %2236 = vmatmul.mubr.bf16.gmra.mrb[0].mxu0 %v2124
        %v2237 = vpop.f32.mrb[0].mxu0
        %v2238 = vadd.f32 %v2153, %v2237
        %v2239 = vpop.f32.mrb[0].mxu0
        %v2240 = vpop.f32.mrb[0].mxu0
        %v2241 = vadd.f32 %v2153, %v2240
        %v2242 = vpop.f32.mrb[0].mxu0
        %2243 = vmatprep.mubr.bf16.mxu0 0
        %2244 = vmatmul.mubr.bf16.gmra.mrb[0].mxu0 %v2125
        %v2245 = vpop.f32.mrb[0].mxu0
        %v2246 = vadd.f32 %v2153, %v2245
        %v2247 = vpop.f32.mrb[0].mxu0
        %v2248 = vpop.f32.mrb[0].mxu0
        %v2249 = vadd.f32 %v2153, %v2248
        %v2250 = vpop.f32.mrb[0].mxu0
        %2251 = vmatprep.mubr.bf16.mxu0 0
        %2252 = vmatmul.mubr.bf16.gmra.mrb[0].mxu0 %v2126
        %v2253 = vpop.f32.mrb[0].mxu0
        %v2254 = vadd.f32 %v2153, %v2253
        %v2255 = vpop.f32.mrb[0].mxu0
        %v2256 = vpop.f32.mrb[0].mxu0
        %v2257 = vadd.f32 %v2153, %v2256
        %v2258 = vpop.f32.mrb[0].mxu0
        %2259 = vmatprep.mubr.bf16.mxu0 0
        %2260 = vmatmul.mubr.bf16.gmra.mrb[0].mxu0 %v2127
        %v2261 = vpop.f32.mrb[0].mxu0
        %v2262 = vadd.f32 %v2153, %v2261
        %v2263 = vpop.f32.mrb[0].mxu0
        %v2264 = vpop.f32.mrb[0].mxu0
        %v2265 = vadd.f32 %v2153, %v2264
        %v2266 = vpop.f32.mrb[0].mxu0
        %2267 = vmatprep.mubr.bf16.mxu0 0
        %2268 = vmatmul.mubr.bf16.gmra.mrb[0].mxu0 %v2128
        %v2269 = vpop.f32.mrb[0].mxu0
        %v2270 = vadd.f32 %v2153, %v2269
        %v2271 = vpop.f32.mrb[0].mxu0
        %v2272 = vpop.f32.mrb[0].mxu0
        %v2273 = vadd.f32 %v2153, %v2272
        %v2274 = vpop.f32.mrb[0].mxu0
        %2275 = vmatprep.mubr.bf16.mxu0 0
        %2276 = vmatmul.mubr.bf16.gmra.mrb[0].mxu0 %v2129
        %v2277 = vpop.f32.mrb[0].mxu0
        %v2278 = vadd.f32 %v2153, %v2277
        %v2279 = vpop.f32.mrb[0].mxu0
        %v2280 = vpop.f32.mrb[0].mxu0
        %v2281 = vadd.f32 %v2153, %v2280
        %v2282 = vpop.f32.mrb[0].mxu0
        %2283 = vmatprep.mubr.bf16.mxu0 0
        %2284 = vmatmul.mubr.bf16.gmra.mrb[0].mxu0 %v2130
        %v2285 = vpop.f32.mrb[0].mxu0
        %v2286 = vadd.f32 %v2153, %v2285
        %v2287 = vpop.f32.mrb[0].mxu0
        %v2288 = vpop.f32.mrb[0].mxu0
        %v2289 = vadd.f32 %v2153, %v2288
        %v2290 = vpop.f32.mrb[0].mxu0
        %2291 = vmatprep.mubr.bf16.mxu0 0
        %2292 = vmatmul.mubr.bf16.gmra.mrb[0].mxu0 %v2131
        %v2293 = vpop.f32.mrb[0].mxu0
        %v2294 = vadd.f32 %v2153, %v2293
        %v2295 = vpop.f32.mrb[0].mxu0
        %v2296 = vpop.f32.mrb[0].mxu0
        %v2297 = vadd.f32 %v2153, %v2296
        %v2298 = vpop.f32.mrb[0].mxu0
        %2299 = vdwg.mxu0
        %v2300 = vxor.u32 %v2238, 2147483648
        %v2301 = vxor.u32 %v2241, 2147483648
        %v2302 = vxor.u32 %v2246, 2147483648
        %v2303 = vxor.u32 %v2249, 2147483648
        %v2304 = vxor.u32 %v2254, 2147483648
        %v2305 = vxor.u32 %v2257, 2147483648
        %v2306 = vxor.u32 %v2262, 2147483648
        %v2307 = vxor.u32 %v2265, 2147483648
        %v2308 = vxor.u32 %v2270, 2147483648
        %v2309 = vxor.u32 %v2273, 2147483648
        %v2310 = vxor.u32 %v2278, 2147483648
        %v2311 = vxor.u32 %v2281, 2147483648
        %v2312 = vxor.u32 %v2286, 2147483648
        %v2313 = vxor.u32 %v2289, 2147483648
        %v2314 = vxor.u32 %v2294, 2147483648
        %v2315 = vxor.u32 %v2297, 2147483648
        %v2316 = vmul.f32 %v2300, 1.442695
        %v2317 = vpow.pop %v2316
        %v2318 = vmul.f32 %v2301, 1.442695
        %v2319 = vpow.pop %v2318
        %v2320 = vmul.f32 %v2302, 1.442695
        %v2321 = vpow.pop %v2320
        %v2322 = vmul.f32 %v2303, 1.442695
        %v2323 = vpow.pop %v2322
        %v2324 = vmul.f32 %v2304, 1.442695
        %v2325 = vpow.pop %v2324
        %v2326 = vmul.f32 %v2305, 1.442695
        %v2327 = vpow.pop %v2326
        %v2328 = vmul.f32 %v2306, 1.442695
        %v2329 = vpow.pop %v2328
        %v2330 = vmul.f32 %v2307, 1.442695
        %v2331 = vpow.pop %v2330
        %v2332 = vmul.f32 %v2308, 1.442695
        %v2333 = vpow.pop %v2332
        %v2334 = vmul.f32 %v2309, 1.442695
        %v2335 = vpow.pop %v2334
        %v2336 = vmul.f32 %v2310, 1.442695
        %v2337 = vpow.pop %v2336
        %v2338 = vmul.f32 %v2311, 1.442695
        %v2339 = vpow.pop %v2338
        %v2340 = vmul.f32 %v2312, 1.442695
        %v2341 = vpow.pop %v2340
        %v2342 = vmul.f32 %v2313, 1.442695
        %v2343 = vpow.pop %v2342
        %v2344 = vmul.f32 %v2314, 1.442695
        %v2345 = vpow.pop %v2344
        %v2346 = vmul.f32 %v2315, 1.442695
        %v2347 = vpow.pop %v2346
        %v2348 = vadd.f32 %v2317, 1.0
        %v2349 = vadd.f32 %v2319, 1.0
        %v2350 = vadd.f32 %v2321, 1.0
        %v2351 = vadd.f32 %v2323, 1.0
        %v2352 = vadd.f32 %v2325, 1.0
        %v2353 = vadd.f32 %v2327, 1.0
        %v2354 = vadd.f32 %v2329, 1.0
        %v2355 = vadd.f32 %v2331, 1.0
        %v2356 = vadd.f32 %v2333, 1.0
        %v2357 = vadd.f32 %v2335, 1.0
        %v2358 = vadd.f32 %v2337, 1.0
        %v2359 = vadd.f32 %v2339, 1.0
        %v2360 = vadd.f32 %v2341, 1.0
        %v2361 = vadd.f32 %v2343, 1.0
        %v2362 = vadd.f32 %v2345, 1.0
        %v2363 = vadd.f32 %v2347, 1.0
        %v2364 = vrcp.pop %v2348
        %v2365 = vmul.f32 1.0, %v2364
        %v2366 = vrcp.pop %v2349
        %v2367 = vmul.f32 1.0, %v2366
        %v2368 = vrcp.pop %v2350
        %v2369 = vmul.f32 1.0, %v2368
        %v2370 = vrcp.pop %v2351
        %v2371 = vmul.f32 1.0, %v2370
        %v2372 = vrcp.pop %v2352
        %v2373 = vmul.f32 1.0, %v2372
        %v2374 = vrcp.pop %v2353
        %v2375 = vmul.f32 1.0, %v2374
        %v2376 = vrcp.pop %v2354
        %v2377 = vmul.f32 1.0, %v2376
        %v2378 = vrcp.pop %v2355
        %v2379 = vmul.f32 1.0, %v2378
        %v2380 = vrcp.pop %v2356
        %v2381 = vmul.f32 1.0, %v2380
        %v2382 = vrcp.pop %v2357
        %v2383 = vmul.f32 1.0, %v2382
        %v2384 = vrcp.pop %v2358
        %v2385 = vmul.f32 1.0, %v2384
        %v2386 = vrcp.pop %v2359
        %v2387 = vmul.f32 1.0, %v2386
        %v2388 = vrcp.pop %v2360
        %v2389 = vmul.f32 1.0, %v2388
        %v2390 = vrcp.pop %v2361
        %v2391 = vmul.f32 1.0, %v2390
        %v2392 = vrcp.pop %v2362
        %v2393 = vmul.f32 1.0, %v2392
        %v2394 = vrcp.pop %v2363
        %v2395 = vmul.f32 1.0, %v2394
        %2396 = vst [vmem:[%s545] sm:$0xff] %v2365
        %2397 = vst [vmem:[%s545 + $0x8] sm:$0xff] %v2367
        %2398 = vst [vmem:[%s545 + $0x10] sm:$0xff] %v2369
        %2399 = vst [vmem:[%s545 + $0x18] sm:$0xff] %v2371
        %2400 = vst [vmem:[%s545 + $0x20] sm:$0xff] %v2373
        %2401 = vst [vmem:[%s545 + $0x28] sm:$0xff] %v2375
        %2402 = vst [vmem:[%s545 + $0x30] sm:$0xff] %v2377
        %2403 = vst [vmem:[%s545 + $0x38] sm:$0xff] %v2379
        %2404 = vst [vmem:[%s545 + $0x40] sm:$0xff] %v2381
        %2405 = vst [vmem:[%s545 + $0x48] sm:$0xff] %v2383
        %2406 = vst [vmem:[%s545 + $0x50] sm:$0xff] %v2385
        %2407 = vst [vmem:[%s545 + $0x58] sm:$0xff] %v2387
        %2408 = vst [vmem:[%s545 + $0x60] sm:$0xff] %v2389
        %2409 = vst [vmem:[%s545 + $0x68] sm:$0xff] %v2391
        %2410 = vst [vmem:[%s545 + $0x70] sm:$0xff] %v2393
        %2411 = vst [vmem:[%s545 + $0x78] sm:$0xff] %v2395
        %s2412 = sand.u32 %s319, 1
        %s2413 = scalar_lea.sflag [#allocation4], %s2412
        %s2414 = sand.u32 %s319, 1
        %s2415 = smul.addr %s2414, 128
        %s2416 = scalar_lea.vmem [#allocation14], %s2415
        // Predicated region
        $region101: #{tpu_custom_call.1} parent=71 // pred_check
          %p2417 = pneg %p329
        $region102: #{tpu_custom_call.1} parent=71 // pred_check_branch
          %2419 = sbr.rel (%p2417) target = $region104
        $region103: #{tpu_custom_call.1} parent=71 // pred_region
          %s2420 = smul.u32 16, %s33
          %s2422 = ssub.s32 2048, 2048
          %2423 = vsyncadd %s2413, %s2422
          %s2424 = smul.addr %s2420, 128
          %s2425 = scalar_lea.hbm %s13, %s2424
          %s2426 = sshll.u32 %s2416, 4
          %s2427 = int_to_ptr.vmem [resolvable:$true] %s2426
          %2432 = dma.vmem_to_hbm [thread:$0]  %s2427, 2048, %s2425, %s2413, 128, 128, 8
        $region104: #{tpu_custom_call.1} parent=71 // pred_fallthru
          _
      $region72: #{tpu_custom_call.1} parent=5 // pred_fallthru
        _
      %p2433 = scmp.le.s32.totalorder 2, %s28
      // Predicated region
      $region105: #{tpu_custom_call.1} parent=5 // pred_check
        %p2434 = pneg %p2433
      $region106: #{tpu_custom_call.1} parent=5 // pred_check_branch
        %2436 = sbr.rel (%p2434) target = $region108
      $region107: #{tpu_custom_call.1} parent=5 // pred_region
        %s2437 = ssub.s32 %s28, 2
        // Predicated region
        $region109: #{tpu_custom_call.1} parent=107 // pred_check
          %p2438 = pneg %p335
        $region110: #{tpu_custom_call.1} parent=107 // pred_check_branch
          %2440 = sbr.rel (%p2438) target = $region112
        $region111: #{tpu_custom_call.1} parent=107 // pred_region
          %s2441 = sand.u32 %s320, 1
          %s2442 = scalar_lea.sflag [#allocation4], %s2441
          %s2443 = sand.u32 %s320, 1
          %s2444 = smul.addr %s2443, 128
          %s2445 = scalar_lea.vmem [#allocation14], %s2444
          %2446 = dma.done %s2442, 2048
        $region112: #{tpu_custom_call.1} parent=107 // pred_fallthru
          _
      $region108: #{tpu_custom_call.1} parent=5 // pred_fallthru
        _
    $region6: #{tpu_custom_call.1} parent=1 // loop_footer
      %s32 = sadd.s32 1, %s28
    $region7: #{tpu_custom_call.1} parent=1 // loop_footer_branch
      %27 = sbr.rel target = $region3
    $region8: #{tpu_custom_call.1} parent=1 // loop_exit
      _
    %2447 = vsyncpa [#allocation3], 1
    %s2448 = scalar_lea.sflag [#allocation3], 1
    %2449 = vsyncpa %s2448, 1
    %2450 = vsyncpa [#allocation6], 1
    %2451 = vsyncpa [#allocation9], 1
    %2452 = vsyncpa [#allocation12], 1
    %2453 = vsyncpa [#allocation4], 1
    %s2454 = scalar_lea.sflag [#allocation4], 1
    %2455 = vsyncpa %s2454, 1

</llo_original>
